<compile_context>
chip_gen: v7x
topology: tpu7x:2x2x1
jax: 0.10.0
libtpu: 0.0.40
codegen_flags: <defaults>
</compile_context>

<pallas_src>
import functools

import jax
import jax.numpy as jnp
from jax.experimental import pallas as pl
from jax.experimental.pallas import tpu as pltpu


# ----------------------- fused projection (matmul) kernel --------------------

def _proj_kernel(x_ref, wm_ref, bm_ref, wa_ref, ba_ref, om_ref, oa_ref):
    x = x_ref[...]
    om_ref[...] = (
        jnp.dot(x, wm_ref[...], preferred_element_type=jnp.float32) + bm_ref[...])
    oa_ref[...] = (
        jnp.dot(x, wa_ref[...], preferred_element_type=jnp.float32) + ba_ref[...])


def pallas_fused_projection(x, w_main, b_main, w_aux, b_aux, *, tm=512):
    """Returns (x @ w_main + b_main, x @ w_aux + b_aux), tiled over rows of x."""
    M, K = x.shape
    Fm = w_main.shape[1]
    Fa = w_aux.shape[1]
    if M <= tm:
        tm = M                        # single full block (small demo sizes)
    else:
        tm = max(8, (tm // 8) * 8)    # row tile must be a multiple of 8
    grid = (pl.cdiv(M, tm),)
    cost = pl.CostEstimate(
        flops=2 * M * K * (Fm + Fa),
        transcendentals=0,
        bytes_accessed=4 * (M * K + (K + 1) * (Fm + Fa) + M * (Fm + Fa)),
    )
    return pl.pallas_call(
        _proj_kernel,
        out_shape=(jax.ShapeDtypeStruct((M, Fm), jnp.float32),
                   jax.ShapeDtypeStruct((M, Fa), jnp.float32)),
        grid=grid,
        in_specs=[
            pl.BlockSpec((tm, K), lambda i: (i, 0)),
            pl.BlockSpec((K, Fm), lambda i: (0, 0)),    # weights resident
            pl.BlockSpec((1, Fm), lambda i: (0, 0)),
            pl.BlockSpec((K, Fa), lambda i: (0, 0)),
            pl.BlockSpec((1, Fa), lambda i: (0, 0)),
        ],
        out_specs=(pl.BlockSpec((tm, Fm), lambda i: (i, 0)),
                   pl.BlockSpec((tm, Fa), lambda i: (i, 0))),
        compiler_params=pltpu.CompilerParams(
            dimension_semantics=("parallel",)),
        cost_estimate=cost,
    )(x, w_main, b_main.reshape(1, Fm), w_aux, b_aux.reshape(1, Fa))


# ----------------------------- attention kernel -------------------------------

def _gat_attn_kernel(ti_ref, tj_ref, te_ref, adj_ref, edge_ref, vnode_ref,
                     o_ref, m_scr, l_scr, acc_scr, *, num_heads, c_head, alpha):
    # ti_ref   : [1, N, H]      term_i  (node_proj . a1)
    # tj_ref   : [1, Tj, H]     term_j  (node_proj . a2)
    # te_ref   : [1, N, Tj, H]  term_e  (edge_proj . a3)
    # adj_ref  : [1, N, Tj]
    # edge_ref : [1, N, Tj, F]  projected edge feats, F = H*C (lane dense)
    # vnode_ref: [N, Tj, F]     batch-independent node part of `values`
    # o_ref    : [1, N, F]
    H, C = num_heads, c_head
    jt = pl.program_id(1)
    n_jt = pl.num_programs(1)

    @pl.when(jt == 0)
    def _():
        m_scr[...] = jnp.full(m_scr.shape, -jnp.inf, m_scr.dtype)
        l_scr[...] = jnp.zeros(l_scr.shape, l_scr.dtype)
        acc_scr[...] = jnp.zeros(acc_scr.shape, acc_scr.dtype)

    term_i = ti_ref[0]                     # [N, H]
    term_j = tj_ref[0]                     # [Tj, H]
    term_e = te_ref[0]                     # [N, Tj, H]
    adj = adj_ref[0]                       # [N, Tj]
    edge = edge_ref[0]                     # [N, Tj, F]
    vnode = vnode_ref[...]                 # [N, Tj, F]
    n_rows = term_i.shape[0]

    # attention logits + LeakyReLU + adjacency masking (attn_matrix.fill_(-9e15))
    logits = term_i[:, None, :] + term_j[None, :, :] + term_e     # [N, Tj, H]
    logits = jnp.where(logits >= 0, logits, alpha * logits)
    masked = jnp.where(adj[:, :, None] == 1.0, logits, jnp.float32(-9e15))

    # online softmax over the (tiled) j axis
    m_prev = m_scr[...]                                           # [N, H]
    m_new = jnp.maximum(m_prev, jnp.max(masked, axis=1))          # [N, H]
    corr = jnp.exp(m_prev - m_new)                                # [N, H]
    p = jnp.exp(masked - m_new[:, None, :])                       # [N, Tj, H]
    l_scr[...] = corr * l_scr[...] + jnp.sum(p, axis=1)
    m_scr[...] = m_new

    # weighted aggregation of values = node(broadcast) + edge:
    #   out[i, h*C + c] += sum_j p[i, j, h] * values[i, j, h*C + c]
    # (per-i weighted sums have no shared contraction matrix, so VPU multiply
    # + XLU sublane reduce is the right unit; accumulator is updated with a
    # single full-width lane-dense store per step).
    values = edge + vnode                                         # [N, Tj, F]
    contribs = []
    corr_cols = []
    for h in range(H):
        cs = slice(h * C, (h + 1) * C)
        ph = p[:, :, h][:, :, None]                               # [N, Tj, 1]
        contribs.append(jnp.sum(ph * values[:, :, cs], axis=1))   # [N, C]
        corr_cols.append(jnp.broadcast_to(corr[:, h][:, None], (n_rows, C)))
    contrib = jnp.concatenate(contribs, axis=-1)                  # [N, F]
    corr_f = jnp.concatenate(corr_cols, axis=-1)                  # [N, F]
    acc_scr[...] = corr_f * acc_scr[...] + contrib

    @pl.when(jt == n_jt - 1)
    def _():
        inv_l = pl.reciprocal(l_scr[...], approx=True)            # [N, H] (EUP)
        acc = acc_scr[...]
        cols = [acc[:, h * C:(h + 1) * C] * inv_l[:, h][:, None] for h in range(H)]
        o_ref[0] = jnp.concatenate(cols, axis=-1).astype(o_ref.dtype)


def _choose_j_tile(n, f, budget_bytes=12 * 1024 * 1024):
    """Largest key-tile (divisor of n, 128-aligned unless full) within budget."""
    def step_bytes(t):
        # double-buffered edge + vnode blocks dominate per-step VMEM
        return 2 * 2 * 4 * n * t * f
    if step_bytes(n) <= budget_bytes:
        return n
    best = None
    t = 128
    while t < n:
        if n % t == 0 and step_bytes(t) <= budget_bytes:
            best = t
        t += 128
    if best is None:
        # TODO(synk): mask ragged tails so unaligned N can still be j-tiled.
        return n
    return best


# ----------------------------- parameter init --------------------------------

def _xavier_uniform(key, shape, fan_in, fan_out, gain):
    bound = gain * (6.0 / (fan_in + fan_out)) ** 0.5
    return jax.random.uniform(key, shape, jnp.float32, -bound, bound)


def init_gat_params(key, c_in, c_out, edge_dim, num_heads, concat_heads=True,
                    gain=1.414):
    if concat_heads:
        assert c_out % num_heads == 0
        c_head = c_out // num_heads
    else:
        c_head = c_out
    f_out = c_head * num_heads
    k1, k2, k3, k4, k5 = jax.random.split(key, 5)
    # weights stored transposed relative to torch.nn.Linear ([in, out])
    w_node = _xavier_uniform(k1, (c_in, f_out), c_in, f_out, gain)
    b_node = jax.random.uniform(k2, (f_out,), jnp.float32,
                                -1.0 / c_in ** 0.5, 1.0 / c_in ** 0.5)
    w_edge = _xavier_uniform(k3, (edge_dim, f_out), edge_dim, f_out, gain)
    b_edge = jax.random.uniform(k4, (f_out,), jnp.float32,
                                -1.0 / edge_dim ** 0.5, 1.0 / edge_dim ** 0.5)
    a = _xavier_uniform(k5, (num_heads, 3 * c_head), 3 * c_head, num_heads, gain)
    return (w_node, b_node, w_edge, b_edge, a)


# ----------------------------- full forward ----------------------------------

def gat_layer_forward(params, node_feats, edge_feats, adj_matrix, *,
                      num_heads, concat_heads=True, alpha=0.2):
    w_node, b_node, w_edge, b_edge, a = params
    B, N, c_in = node_feats.shape
    edge_dim = edge_feats.shape[-1]
    F = w_node.shape[1]
    H = num_heads
    C = F // H
    assert B == N, "reference `node_feats + edge_feats` broadcast requires B == N"

    a1, a2, a3 = a[:, :C], a[:, C:2 * C], a[:, 2 * C:]

    # Fold the attention-vector dot products into the projection matmuls:
    #   term_i = <node_proj, a1> = x @ (W . a1) + <b, a1>   (exactly linear)
    w_node_h = w_node.reshape(c_in, H, C)
    b_node_h = b_node.reshape(H, C)
    w_node_aux = jnp.concatenate(
        [jnp.einsum('khc,hc->kh', w_node_h, a1),
         jnp.einsum('khc,hc->kh', w_node_h, a2)], axis=1)          # [c_in, 2H]
    b_node_aux = jnp.concatenate(
        [jnp.einsum('hc,hc->h', b_node_h, a1),
         jnp.einsum('hc,hc->h', b_node_h, a2)], axis=0)            # [2H]
    w_edge_aux = jnp.einsum('khc,hc->kh', w_edge.reshape(edge_dim, H, C), a3)
    b_edge_aux = jnp.einsum('hc,hc->h', b_edge.reshape(H, C), a3)

    # --- projections (Pallas kernels, MXU) ---
    node_proj_f, node_aux_f = pallas_fused_projection(
        node_feats.reshape(B * N, c_in), w_node, b_node, w_node_aux, b_node_aux)
    edge_proj_f, edge_aux_f = pallas_fused_projection(
        edge_feats.reshape(B * N * N, edge_dim), w_edge, b_edge,
        w_edge_aux, b_edge_aux)

    node_proj = node_proj_f.reshape(B, N, F)        # lane-dense [.., H*C]
    term_i = node_aux_f[:, :H].reshape(B, N, H)
    term_j = node_aux_f[:, H:].reshape(B, N, H)
    edge_proj = edge_proj_f.reshape(B, N, N, F)     # natural layout, no transpose
    term_e = edge_aux_f.reshape(B, N, N, H)
    adj_f = adj_matrix.astype(jnp.float32)

    tj = _choose_j_tile(N, F)
    n_jt = N // tj

    kern = functools.partial(_gat_attn_kernel, num_heads=H, c_head=C, alpha=alpha)
    cost = pl.CostEstimate(
        flops=2 * B * N * N * F + 8 * B * N * N * H,
        transcendentals=B * N * N * H + B * N * H * n_jt,
        bytes_accessed=4 * (B * N * N * (F + H + 1) + 3 * B * N * H
                            + N * N * F + B * N * F),
    )
    out = pl.pallas_call(
        kern,
        out_shape=jax.ShapeDtypeStruct((B, N, F), jnp.float32),
        grid=(B, n_jt),
        in_specs=[
            pl.BlockSpec((1, N, H), lambda b, j: (b, 0, 0)),          # term_i
            pl.BlockSpec((1, tj, H), lambda b, j: (b, j, 0)),         # term_j
            pl.BlockSpec((1, N, tj, H), lambda b, j: (b, 0, j, 0)),   # term_e
            pl.BlockSpec((1, N, tj), lambda b, j: (b, 0, j)),         # adjacency
            pl.BlockSpec((1, N, tj, F), lambda b, j: (b, 0, j, 0)),   # edge_proj
            pl.BlockSpec((B, tj, F), lambda b, j: (0, j, 0)),         # vnode (shared)
        ],
        out_specs=pl.BlockSpec((1, N, F), lambda b, j: (b, 0, 0)),
        scratch_shapes=[
            pltpu.VMEM((N, H), jnp.float32),   # running max
            pltpu.VMEM((N, H), jnp.float32),   # running sum
            pltpu.VMEM((N, F), jnp.float32),   # output accumulator
        ],
        compiler_params=pltpu.CompilerParams(
            dimension_semantics=("parallel", "arbitrary"),
            vmem_limit_bytes=32 * 1024 * 1024),
        cost_estimate=cost,
    )(term_i, term_j, term_e, adj_f, edge_proj, node_proj)

    if concat_heads:
        return out                                  # already [B, N, H*C]
    return out.reshape(B, N, H, C).mean(axis=2)


# ----------------------------- pure-JAX reference ----------------------------

def gat_layer_reference(params, node_feats, edge_feats, adj, *, num_heads,
                        concat_heads=True, alpha=0.2):
    w_node, b_node, w_edge, b_edge, a = params
    B, N, c_in = node_feats.shape
    f_out = w_node.shape[1]
    C = f_out // num_heads
    node = (node_feats.reshape(B * N, c_in) @ w_node + b_node
            ).reshape(B, N, num_heads, C)
    edge = (edge_feats.reshape(B * N * N, -1) @ w_edge + b_edge
            ).reshape(B, N, N, num_heads, C)
    a1, a2, a3 = a[:, :C], a[:, C:2 * C], a[:, 2 * C:]
    term_i = jnp.einsum('bihc,hc->bih', node, a1)
    term_j = jnp.einsum('bjhc,hc->bjh', node, a2)
    term_e = jnp.einsum('bijhc,hc->bijh', edge, a3)
    logits = term_i[:, :, None, :] + term_j[:, None, :, :] + term_e
    logits = jnp.where(logits >= 0, logits, alpha * logits)
    masked = jnp.where(adj[..., None] == 1, logits, -9e15)
    probs = jax.nn.softmax(masked, axis=2)
    values = node + edge            # same quirky broadcast as the torch reference
    out = jnp.einsum('bijh,bijhc->bihc', probs, values)
    if concat_heads:
        return out.reshape(B, N, num_heads * C)
    return out.mean(axis=2)


# ----------------------------- demo ------------------------------------------

if __name__ == "__main__":
    # Full-precision f32 matmuls everywhere so the Pallas path (which folds the
    # attention terms into the projection matmul) and the pure-JAX reference
    # agree closely; the remaining difference is the approximate (EUP)
    # reciprocal used for softmax normalization.
    jax.config.update("jax_default_matmul_precision", "highest")

    # B == N is required by the reference `node_feats + edge_feats` broadcast.
    B = N = 8
    c_in, edge_dim = 6, 5
    c_out, num_heads = 16, 2
    alpha = 0.2

    key = jax.random.PRNGKey(0)
    kp, kn, ke = jax.random.split(key, 3)
    params = init_gat_params(kp, c_in, c_out, edge_dim, num_heads)

    node_feats = jax.random.normal(kn, (B, N, c_in), jnp.float32)
    edge_feats = jax.random.normal(ke, (B, N, N, edge_dim), jnp.float32)
    # Fully-connected adjacency incl. self connections (required for the
    # reference torch.cat to be shape-consistent).
    adj_matrix = jnp.ones((B, N, N), jnp.float32)

    out = gat_layer_forward(params, node_feats, edge_feats, adj_matrix,
                            num_heads=num_heads, concat_heads=True, alpha=alpha)
    out = jax.block_until_ready(out)

    ref = gat_layer_reference(params, node_feats, edge_feats, adj_matrix,
                              num_heads=num_heads, concat_heads=True,
                              alpha=alpha)
    assert out.shape == (B, N, c_out), out.shape
    max_err = float(jnp.max(jnp.abs(out - ref)))
    # Tolerance covers the approximate reciprocal used for softmax norm.
    if max_err > 2e-2:
        raise AssertionError(f"Pallas output mismatch, max_err={max_err}")
    print("KERNEL_OK")
</pallas_src>

<mosaic_0001>
module attributes {stable_mosaic.version = 11 : i64} {
  func.func @_proj_kernel(%arg0: i32, %arg1: memref<64x6xf32, #tpu.memory_space<vmem>>, %arg2: memref<6x16xf32, #tpu.memory_space<vmem>>, %arg3: memref<1x16xf32, #tpu.memory_space<vmem>>, %arg4: memref<6x4xf32, #tpu.memory_space<vmem>>, %arg5: memref<1x4xf32, #tpu.memory_space<vmem>>, %arg6: memref<64x16xf32, #tpu.memory_space<vmem>>, %arg7: memref<64x4xf32, #tpu.memory_space<vmem>>) attributes {dimension_semantics = [#tpu.dimension_semantics<parallel>], iteration_bounds = array<i64: 1>, scalar_prefetch = 0 : i64, scratch_operands = 0 : i64, tpu.core_type = #tpu.core_type<tc>, window_params = [{transform_indices = @transform_0, window_bounds = array<i64: 64, 6>}, {pipeline_mode = #tpu.pipeline_mode<synchronous>, transform_indices = @transform_1, window_bounds = array<i64: 6, 16>}, {pipeline_mode = #tpu.pipeline_mode<synchronous>, transform_indices = @transform_2, window_bounds = array<i64: 1, 16>}, {pipeline_mode = #tpu.pipeline_mode<synchronous>, transform_indices = @transform_3, window_bounds = array<i64: 6, 4>}, {pipeline_mode = #tpu.pipeline_mode<synchronous>, transform_indices = @transform_4, window_bounds = array<i64: 1, 4>}, {transform_indices = @transform_5, window_bounds = array<i64: 64, 16>}, {transform_indices = @transform_6, window_bounds = array<i64: 64, 4>}]} {
    %c0 = arith.constant 0 : index
    %c0_0 = arith.constant 0 : index
    %0 = vector.load %arg1[%c0, %c0_0] : memref<64x6xf32, #tpu.memory_space<vmem>>, vector<64x6xf32>
    %c0_1 = arith.constant 0 : index
    %c0_2 = arith.constant 0 : index
    %1 = vector.load %arg2[%c0_1, %c0_2] : memref<6x16xf32, #tpu.memory_space<vmem>>, vector<6x16xf32>
    %cst = arith.constant dense<0.000000e+00> : vector<64x16xf32>
    %2 = tpu.matmul %0, %1, %cst {dimension_numbers = #tpu.dot_dimension_numbers<[1], [0], [0], [1], [0, 0, 1, 1], [], []>, precision = #tpu.contract_precision<fp32>} : vector<64x6xf32>, vector<6x16xf32>, vector<64x16xf32> -> vector<64x16xf32>
    %c0_3 = arith.constant 0 : index
    %c0_4 = arith.constant 0 : index
    %3 = vector.load %arg3[%c0_3, %c0_4] : memref<1x16xf32, #tpu.memory_space<vmem>>, vector<1x16xf32>
    %4 = vector.broadcast %3 : vector<1x16xf32> to vector<64x16xf32>
    %5 = arith.addf %2, %4 : vector<64x16xf32>
    %c0_5 = arith.constant 0 : index
    %c0_6 = arith.constant 0 : index
    %6 = vector.load %arg6[%c0_5, %c0_6] : memref<64x16xf32, #tpu.memory_space<vmem>>, vector<64x16xf32>
    tpu.vector_store %arg6[%c0_5, %c0_6], %5 {strides = array<i32>} : memref<64x16xf32, #tpu.memory_space<vmem>>, vector<64x16xf32>,
    %c0_7 = arith.constant 0 : index
    %c0_8 = arith.constant 0 : index
    %7 = vector.load %arg4[%c0_7, %c0_8] : memref<6x4xf32, #tpu.memory_space<vmem>>, vector<6x4xf32>
    %cst_9 = arith.constant dense<0.000000e+00> : vector<64x4xf32>
    %8 = tpu.matmul %0, %7, %cst_9 {dimension_numbers = #tpu.dot_dimension_numbers<[1], [0], [0], [1], [0, 0, 1, 1], [], []>, precision = #tpu.contract_precision<fp32>} : vector<64x6xf32>, vector<6x4xf32>, vector<64x4xf32> -> vector<64x4xf32>
    %c0_10 = arith.constant 0 : index
    %c0_11 = arith.constant 0 : index
    %9 = vector.load %arg5[%c0_10, %c0_11] : memref<1x4xf32, #tpu.memory_space<vmem>>, vector<1x4xf32>
    %10 = vector.broadcast %9 : vector<1x4xf32> to vector<64x4xf32>
    %11 = arith.addf %8, %10 : vector<64x4xf32>
    %c0_12 = arith.constant 0 : index
    %c0_13 = arith.constant 0 : index
    %12 = vector.load %arg7[%c0_12, %c0_13] : memref<64x4xf32, #tpu.memory_space<vmem>>, vector<64x4xf32>
    tpu.vector_store %arg7[%c0_12, %c0_13], %11 {strides = array<i32>} : memref<64x4xf32, #tpu.memory_space<vmem>>, vector<64x4xf32>,
    return
  }
  func.func @transform_0(%arg0: i32) -> (i32, i32) {
    %c0_i32 = arith.constant 0 : i32
    %c0_i32_0 = arith.constant 0 : i32
    return %arg0, %c0_i32 : i32, i32
  }
  func.func @transform_1(%arg0: i32) -> (i32, i32) {
    %c0_i32 = arith.constant 0 : i32
    %c0_i32_0 = arith.constant 0 : i32
    %c0_i32_1 = arith.constant 0 : i32
    return %c0_i32, %c0_i32_0 : i32, i32
  }
  func.func @transform_2(%arg0: i32) -> (i32, i32) {
    %c0_i32 = arith.constant 0 : i32
    %c0_i32_0 = arith.constant 0 : i32
    %c0_i32_1 = arith.constant 0 : i32
    return %c0_i32, %c0_i32_0 : i32, i32
  }
  func.func @transform_3(%arg0: i32) -> (i32, i32) {
    %c0_i32 = arith.constant 0 : i32
    %c0_i32_0 = arith.constant 0 : i32
    %c0_i32_1 = arith.constant 0 : i32
    return %c0_i32, %c0_i32_0 : i32, i32
  }
  func.func @transform_4(%arg0: i32) -> (i32, i32) {
    %c0_i32 = arith.constant 0 : i32
    %c0_i32_0 = arith.constant 0 : i32
    %c0_i32_1 = arith.constant 0 : i32
    return %c0_i32, %c0_i32_0 : i32, i32
  }
  func.func @transform_5(%arg0: i32) -> (i32, i32) {
    %c0_i32 = arith.constant 0 : i32
    %c0_i32_0 = arith.constant 0 : i32
    return %arg0, %c0_i32 : i32, i32
  }
  func.func @transform_6(%arg0: i32) -> (i32, i32) {
    %c0_i32 = arith.constant 0 : i32
    %c0_i32_0 = arith.constant 0 : i32
    return %arg0, %c0_i32 : i32, i32
  }
}

</mosaic_0001>

<llo_original>
// kernel: tpu_custom_call.1
$region0: #{tpu_custom_call.1}
  #allocation0 [shape = 'u32[]', space=smem, size = 0x4, offset = 0x4, fixed_abs, tag = 'smem constant byte address 0x4 - core index']
  #allocation1 [shape = 'u32[144,128]{1,0:T(1,128)}', space=vmem, size = 0x12000, scoped, tag = 'internal scratch']
  %s0 = inlined_call_operand.vmem [shape: f32[64,6], index: 0, kind: input, shape index: {}]
  %s1 = inlined_call_operand.vmem [shape: f32[6,16], index: 1, kind: input, shape index: {}]
  %s2 = inlined_call_operand.vmem [shape: f32[1,16], index: 2, kind: input, shape index: {}]
  %s3 = inlined_call_operand.vmem [shape: f32[6,4], index: 3, kind: input, shape index: {}]
  %s4 = inlined_call_operand.vmem [shape: f32[1,4], index: 4, kind: input, shape index: {}]
  %s5 = inlined_call_operand.vmem [shape: f32[64,16], index: 5, kind: output, shape index: {0}]
  %s6 = inlined_call_operand.vmem [shape: f32[64,4], index: 6, kind: output, shape index: {1}]
  %7 = xla_tuple %s5, %s6
  %s8 = sld [smem:[#allocation0]]
  $region38: #{tpu_custom_call.1} parent=0
    _
  %s10 = ssub.s32 1, %s8
  %s11 = scalar_select 0, %s10, %s8
  // Predicated region
  $region2: #{tpu_custom_call.1} parent=0 // pred_check
    _
  $region3: #{tpu_custom_call.1} parent=0 // pred_check_branch
    %13 = sbr.rel (0) target = $region5
  $region4: #{tpu_custom_call.1} parent=0 // pred_region
    _
  $region5: #{tpu_custom_call.1} parent=0 // pred_fallthru
    _
  // Predicated region
  $region6: #{tpu_custom_call.1} parent=0 // pred_check
    _
  $region7: #{tpu_custom_call.1} parent=0 // pred_check_branch
    %15 = sbr.rel (0) target = $region9
  $region8: #{tpu_custom_call.1} parent=0 // pred_region
    _
  $region9: #{tpu_custom_call.1} parent=0 // pred_fallthru
    _
  // Predicated region
  $region10: #{tpu_custom_call.1} parent=0 // pred_check
    _
  $region11: #{tpu_custom_call.1} parent=0 // pred_check_branch
    %17 = sbr.rel (0) target = $region13
  $region12: #{tpu_custom_call.1} parent=0 // pred_region
    _
  $region13: #{tpu_custom_call.1} parent=0 // pred_fallthru
    _
  // Predicated region
  $region14: #{tpu_custom_call.1} parent=0 // pred_check
    _
  $region15: #{tpu_custom_call.1} parent=0 // pred_check_branch
    %19 = sbr.rel (0) target = $region17
  $region16: #{tpu_custom_call.1} parent=0 // pred_region
    _
  $region17: #{tpu_custom_call.1} parent=0 // pred_fallthru
    _
  // Predicated region
  $region18: #{tpu_custom_call.1} parent=0 // pred_check
    _
  $region19: #{tpu_custom_call.1} parent=0 // pred_check_branch
    %21 = sbr.rel (0) target = $region21
  $region20: #{tpu_custom_call.1} parent=0 // pred_region
    _
  $region21: #{tpu_custom_call.1} parent=0 // pred_fallthru
    _
  %v22 = vld [vmem:[%s0] sm:$0xff]
  %v23 = vld [vmem:[%s0 + $0x8] sm:$0xff]
  %v24 = vld [vmem:[%s0 + $0x10] sm:$0xff]
  %v25 = vld [vmem:[%s0 + $0x18] sm:$0xff]
  %v26 = vld [vmem:[%s0 + $0x20] sm:$0xff]
  %v27 = vld [vmem:[%s0 + $0x28] sm:$0xff]
  %v28 = vld [vmem:[%s0 + $0x30] sm:$0xff]
  %v29 = vld [vmem:[%s0 + $0x38] sm:$0xff]
  %v30 = vld [vmem:[%s1] sm:$0x3f]
  %v31 = vld [vmem:[%s2] sm:$0x1]
  %v33 = vlaneseq
  %v34 = vshrl.u32 %v33, 7
  %v35 = vsub.s32 0, %v34
  %v36 = vrot.slane %v31, %v35
  %vm38 = vcmask 48128
  %v40 = vsel %vm38, %v22, 0
  %v43 = vsel %vm38, %v23, 0
  %v46 = vsel %vm38, %v24, 0
  %v49 = vsel %vm38, %v25, 0
  %v52 = vsel %vm38, %v26, 0
  %v55 = vsel %vm38, %v27, 0
  %v58 = vsel %vm38, %v28, 0
  %v61 = vsel %vm38, %v29, 0
  %vm63 = vcmask 1045504
  %v65 = vsel %vm63, %v30, 0
  %67 = vmatprep.subr.mxu0 0.0
  %v68 = vand.u32 %v65, 4294901760
  %69 = vmatpush1.msra.mxu0 %v68
  %70 = vmatprep.subr.mxu0 0.0
  %71 = vmatpush1.msra.mxu0 0.0
  %72 = vmatprep.subr.mxu0 0.0
  %73 = vmatpush1.msra.mxu0 0.0
  %74 = vmatprep.subr.mxu0 0.0
  %75 = vmatpush1.msra.mxu0 0.0
  %76 = vmatprep.subr.mxu0 0.0
  %77 = vmatpush1.msra.mxu0 0.0
  %78 = vmatprep.subr.mxu0 0.0
  %79 = vmatpush1.msra.mxu0 0.0
  %80 = vmatprep.subr.mxu0 0.0
  %81 = vmatpush1.msra.mxu0 0.0
  %82 = vmatprep.subr.mxu0 0.0
  %83 = vmatpush1.msra.mxu0 0.0
  %84 = vmatprep.subr.mxu0 0.0
  %85 = vmatpush1.msra.mxu0 0.0
  %86 = vmatprep.subr.mxu0 0.0
  %87 = vmatpush1.msra.mxu0 0.0
  %88 = vmatprep.subr.mxu0 0.0
  %89 = vmatpush1.msra.mxu0 0.0
  %90 = vmatprep.subr.mxu0 0.0
  %91 = vmatpush1.msra.mxu0 0.0
  %92 = vmatprep.subr.mxu0 0.0
  %93 = vmatpush1.msra.mxu0 0.0
  %94 = vmatprep.subr.mxu0 0.0
  %95 = vmatpush1.msra.mxu0 0.0
  %96 = vmatprep.subr.mxu0 0.0
  %97 = vmatpush1.msra.mxu0 0.0
  %98 = vmatprep.subr.mxu0 0.0
  %99 = vmatpush1.msra.mxu0 0.0
  %100 = vmatprep.subr.mxu0 0.0
  %101 = vmatpush1.msra.mxu0 0.0
  %102 = vmatprep.subr.mxu0 0.0
  %103 = vmatpush1.msra.mxu0 0.0
  %104 = vmatprep.subr.mxu0 0.0
  %105 = vmatpush1.msra.mxu0 0.0
  %106 = vmatprep.subr.mxu0 0.0
  %107 = vmatpush1.msra.mxu0 0.0
  %108 = vmatprep.subr.mxu0 0.0
  %109 = vmatpush1.msra.mxu0 0.0
  %110 = vmatprep.subr.mxu0 0.0
  %111 = vmatpush1.msra.mxu0 0.0
  %112 = vmatprep.subr.mxu0 0.0
  %113 = vmatpush1.msra.mxu0 0.0
  %114 = vmatprep.subr.mxu0 0.0
  %115 = vmatpush1.msra.mxu0 0.0
  %116 = vmatprep.subr.mxu0 0.0
  %117 = vmatpush1.msra.mxu0 0.0
  %118 = vmatprep.subr.mxu0 0.0
  %119 = vmatpush1.msra.mxu0 0.0
  %120 = vmatprep.subr.mxu0 0.0
  %121 = vmatpush1.msra.mxu0 0.0
  %122 = vmatprep.subr.mxu0 0.0
  %123 = vmatpush1.msra.mxu0 0.0
  %124 = vmatprep.subr.mxu0 0.0
  %125 = vmatpush1.msra.mxu0 0.0
  %126 = vmatprep.subr.mxu0 0.0
  %127 = vmatpush1.msra.mxu0 0.0
  %128 = vmatprep.subr.mxu0 0.0
  %129 = vmatpush1.msra.mxu0 0.0
  %130 = vmatprep.subr.mxu0 0.0
  %131 = vmatpush1.msra.mxu0 0.0
  %132 = vmatprep.mubr.f32.mxu0 0.0
  %v133 = vand.u32 %v40, 4294901760
  %v134 = vsub.f32 %v40, %v133
  %v135 = vand.u32 %v134, 4294901760
  %v136 = vsub.f32 %v134, %v135
  %v137 = vand.u32 %v136, 4294901760
  %138 = vmatmul.mubr.f32.gmra.mrb[0].mxu0 %v137
  %v139 = vpop.f32.mrb[0].mxu0
  %v140 = vadd.f32 %v36, %v139
  %v141 = vpop.f32.mrb[0].mxu0
  %142 = vmatprep.mubr.f32.mxu0 0.0
  %v143 = vand.u32 %v43, 4294901760
  %v144 = vsub.f32 %v43, %v143
  %v145 = vand.u32 %v144, 4294901760
  %v146 = vsub.f32 %v144, %v145
  %v147 = vand.u32 %v146, 4294901760
  %148 = vmatmul.mubr.f32.gmra.mrb[0].mxu0 %v147
  %v149 = vpop.f32.mrb[0].mxu0
  %v150 = vadd.f32 %v36, %v149
  %v151 = vpop.f32.mrb[0].mxu0
  %152 = vmatprep.mubr.f32.mxu0 0.0
  %v153 = vand.u32 %v46, 4294901760
  %v154 = vsub.f32 %v46, %v153
  %v155 = vand.u32 %v154, 4294901760
  %v156 = vsub.f32 %v154, %v155
  %v157 = vand.u32 %v156, 4294901760
  %158 = vmatmul.mubr.f32.gmra.mrb[0].mxu0 %v157
  %v159 = vpop.f32.mrb[0].mxu0
  %v160 = vadd.f32 %v36, %v159
  %v161 = vpop.f32.mrb[0].mxu0
  %162 = vmatprep.mubr.f32.mxu0 0.0
  %v163 = vand.u32 %v49, 4294901760
  %v164 = vsub.f32 %v49, %v163
  %v165 = vand.u32 %v164, 4294901760
  %v166 = vsub.f32 %v164, %v165
  %v167 = vand.u32 %v166, 4294901760
  %168 = vmatmul.mubr.f32.gmra.mrb[0].mxu0 %v167
  %v169 = vpop.f32.mrb[0].mxu0
  %v170 = vadd.f32 %v36, %v169
  %v171 = vpop.f32.mrb[0].mxu0
  %172 = vmatprep.mubr.f32.mxu0 0.0
  %v173 = vand.u32 %v52, 4294901760
  %v174 = vsub.f32 %v52, %v173
  %v175 = vand.u32 %v174, 4294901760
  %v176 = vsub.f32 %v174, %v175
  %v177 = vand.u32 %v176, 4294901760
  %178 = vmatmul.mubr.f32.gmra.mrb[0].mxu0 %v177
  %v179 = vpop.f32.mrb[0].mxu0
  %v180 = vadd.f32 %v36, %v179
  %v181 = vpop.f32.mrb[0].mxu0
  %182 = vmatprep.mubr.f32.mxu0 0.0
  %v183 = vand.u32 %v55, 4294901760
  %v184 = vsub.f32 %v55, %v183
  %v185 = vand.u32 %v184, 4294901760
  %v186 = vsub.f32 %v184, %v185
  %v187 = vand.u32 %v186, 4294901760
  %188 = vmatmul.mubr.f32.gmra.mrb[0].mxu0 %v187
  %v189 = vpop.f32.mrb[0].mxu0
  %v190 = vadd.f32 %v36, %v189
  %v191 = vpop.f32.mrb[0].mxu0
  %192 = vmatprep.mubr.f32.mxu0 0.0
  %v193 = vand.u32 %v58, 4294901760
  %v194 = vsub.f32 %v58, %v193
  %v195 = vand.u32 %v194, 4294901760
  %v196 = vsub.f32 %v194, %v195
  %v197 = vand.u32 %v196, 4294901760
  %198 = vmatmul.mubr.f32.gmra.mrb[0].mxu0 %v197
  %v199 = vpop.f32.mrb[0].mxu0
  %v200 = vadd.f32 %v36, %v199
  %v201 = vpop.f32.mrb[0].mxu0
  %202 = vmatprep.mubr.f32.mxu0 0.0
  %v203 = vand.u32 %v61, 4294901760
  %v204 = vsub.f32 %v61, %v203
  %v205 = vand.u32 %v204, 4294901760
  %v206 = vsub.f32 %v204, %v205
  %v207 = vand.u32 %v206, 4294901760
  %208 = vmatmul.mubr.f32.gmra.mrb[0].mxu0 %v207
  %v209 = vpop.f32.mrb[0].mxu0
  %v210 = vadd.f32 %v36, %v209
  %v211 = vpop.f32.mrb[0].mxu0
  %212 = vdwg.mxu0
  %213 = vmatprep.subr.mxu0 0.0
  %v214 = vand.u32 %v65, 4294901760
  %v215 = vsub.f32 %v65, %v214
  %v216 = vand.u32 %v215, 4294901760
  %v217 = vsub.f32 %v215, %v216
  %v218 = vand.u32 %v217, 4294901760
  %219 = vmatpush1.msra.mxu0 %v218
  %220 = vmatprep.subr.mxu0 0.0
  %221 = vmatpush1.msra.mxu0 0.0
  %222 = vmatprep.subr.mxu0 0.0
  %223 = vmatpush1.msra.mxu0 0.0
  %224 = vmatprep.subr.mxu0 0.0
  %225 = vmatpush1.msra.mxu0 0.0
  %226 = vmatprep.subr.mxu0 0.0
  %227 = vmatpush1.msra.mxu0 0.0
  %228 = vmatprep.subr.mxu0 0.0
  %229 = vmatpush1.msra.mxu0 0.0
  %230 = vmatprep.subr.mxu0 0.0
  %231 = vmatpush1.msra.mxu0 0.0
  %232 = vmatprep.subr.mxu0 0.0
  %233 = vmatpush1.msra.mxu0 0.0
  %234 = vmatprep.subr.mxu0 0.0
  %235 = vmatpush1.msra.mxu0 0.0
  %236 = vmatprep.subr.mxu0 0.0
  %237 = vmatpush1.msra.mxu0 0.0
  %238 = vmatprep.subr.mxu0 0.0
  %239 = vmatpush1.msra.mxu0 0.0
  %240 = vmatprep.subr.mxu0 0.0
  %241 = vmatpush1.msra.mxu0 0.0
  %242 = vmatprep.subr.mxu0 0.0
  %243 = vmatpush1.msra.mxu0 0.0
  %244 = vmatprep.subr.mxu0 0.0
  %245 = vmatpush1.msra.mxu0 0.0
  %246 = vmatprep.subr.mxu0 0.0
  %247 = vmatpush1.msra.mxu0 0.0
  %248 = vmatprep.subr.mxu0 0.0
  %249 = vmatpush1.msra.mxu0 0.0
  %250 = vmatprep.subr.mxu0 0.0
  %251 = vmatpush1.msra.mxu0 0.0
  %252 = vmatprep.subr.mxu0 0.0
  %253 = vmatpush1.msra.mxu0 0.0
  %254 = vmatprep.subr.mxu0 0.0
  %255 = vmatpush1.msra.mxu0 0.0
  %256 = vmatprep.subr.mxu0 0.0
  %257 = vmatpush1.msra.mxu0 0.0
  %258 = vmatprep.subr.mxu0 0.0
  %259 = vmatpush1.msra.mxu0 0.0
  %260 = vmatprep.subr.mxu0 0.0
  %261 = vmatpush1.msra.mxu0 0.0
  %262 = vmatprep.subr.mxu0 0.0
  %263 = vmatpush1.msra.mxu0 0.0
  %264 = vmatprep.subr.mxu0 0.0
  %265 = vmatpush1.msra.mxu0 0.0
  %266 = vmatprep.subr.mxu0 0.0
  %267 = vmatpush1.msra.mxu0 0.0
  %268 = vmatprep.subr.mxu0 0.0
  %269 = vmatpush1.msra.mxu0 0.0
  %270 = vmatprep.subr.mxu0 0.0
  %271 = vmatpush1.msra.mxu0 0.0
  %272 = vmatprep.subr.mxu0 0.0
  %273 = vmatpush1.msra.mxu0 0.0
  %274 = vmatprep.subr.mxu0 0.0
  %275 = vmatpush1.msra.mxu0 0.0
  %276 = vmatprep.subr.mxu0 0.0
  %277 = vmatpush1.msra.mxu0 0.0
  %278 = vmatprep.subr.mxu0 0.0
  %279 = vmatpush1.msra.mxu0 0.0
  %280 = vmatprep.subr.mxu0 0.0
  %281 = vmatpush1.msra.mxu0 0.0
  %282 = vmatprep.mubr.f32.mxu0 0.0
  %v283 = vand.u32 %v40, 4294901760
  %284 = vmatmul.mubr.f32.gmra.mrb[0].mxu0 %v283
  %v285 = vpop.f32.mrb[0].mxu0
  %v286 = vadd.f32 %v140, %v285
  %v287 = vpop.f32.mrb[0].mxu0
  %288 = vmatprep.mubr.f32.mxu0 0.0
  %v289 = vand.u32 %v43, 4294901760
  %290 = vmatmul.mubr.f32.gmra.mrb[0].mxu0 %v289
  %v291 = vpop.f32.mrb[0].mxu0
  %v292 = vadd.f32 %v150, %v291
  %v293 = vpop.f32.mrb[0].mxu0
  %294 = vmatprep.mubr.f32.mxu0 0.0
  %v295 = vand.u32 %v46, 4294901760
  %296 = vmatmul.mubr.f32.gmra.mrb[0].mxu0 %v295
  %v297 = vpop.f32.mrb[0].mxu0
  %v298 = vadd.f32 %v160, %v297
  %v299 = vpop.f32.mrb[0].mxu0
  %300 = vmatprep.mubr.f32.mxu0 0.0
  %v301 = vand.u32 %v49, 4294901760
  %302 = vmatmul.mubr.f32.gmra.mrb[0].mxu0 %v301
  %v303 = vpop.f32.mrb[0].mxu0
  %v304 = vadd.f32 %v170, %v303
  %v305 = vpop.f32.mrb[0].mxu0
  %306 = vmatprep.mubr.f32.mxu0 0.0
  %v307 = vand.u32 %v52, 4294901760
  %308 = vmatmul.mubr.f32.gmra.mrb[0].mxu0 %v307
  %v309 = vpop.f32.mrb[0].mxu0
  %v310 = vadd.f32 %v180, %v309
  %v311 = vpop.f32.mrb[0].mxu0
  %312 = vmatprep.mubr.f32.mxu0 0.0
  %v313 = vand.u32 %v55, 4294901760
  %314 = vmatmul.mubr.f32.gmra.mrb[0].mxu0 %v313
  %v315 = vpop.f32.mrb[0].mxu0
  %v316 = vadd.f32 %v190, %v315
  %v317 = vpop.f32.mrb[0].mxu0
  %318 = vmatprep.mubr.f32.mxu0 0.0
  %v319 = vand.u32 %v58, 4294901760
  %320 = vmatmul.mubr.f32.gmra.mrb[0].mxu0 %v319
  %v321 = vpop.f32.mrb[0].mxu0
  %v322 = vadd.f32 %v200, %v321
  %v323 = vpop.f32.mrb[0].mxu0
  %324 = vmatprep.mubr.f32.mxu0 0.0
  %v325 = vand.u32 %v61, 4294901760
  %326 = vmatmul.mubr.f32.gmra.mrb[0].mxu0 %v325
  %v327 = vpop.f32.mrb[0].mxu0
  %v328 = vadd.f32 %v210, %v327
  %v329 = vpop.f32.mrb[0].mxu0
  %330 = vdwg.mxu0
  %331 = vmatprep.subr.mxu0 0.0
  %v332 = vand.u32 %v65, 4294901760
  %v333 = vsub.f32 %v65, %v332
  %334 = vmatpush1.msra.mxu0 %v333
  %335 = vmatprep.subr.mxu0 0.0
  %336 = vmatpush1.msra.mxu0 0.0
  %337 = vmatprep.subr.mxu0 0.0
  %338 = vmatpush1.msra.mxu0 0.0
  %339 = vmatprep.subr.mxu0 0.0
  %340 = vmatpush1.msra.mxu0 0.0
  %341 = vmatprep.subr.mxu0 0.0
  %342 = vmatpush1.msra.mxu0 0.0
  %343 = vmatprep.subr.mxu0 0.0
  %344 = vmatpush1.msra.mxu0 0.0
  %345 = vmatprep.subr.mxu0 0.0
  %346 = vmatpush1.msra.mxu0 0.0
  %347 = vmatprep.subr.mxu0 0.0
  %348 = vmatpush1.msra.mxu0 0.0
  %349 = vmatprep.subr.mxu0 0.0
  %350 = vmatpush1.msra.mxu0 0.0
  %351 = vmatprep.subr.mxu0 0.0
  %352 = vmatpush1.msra.mxu0 0.0
  %353 = vmatprep.subr.mxu0 0.0
  %354 = vmatpush1.msra.mxu0 0.0
  %355 = vmatprep.subr.mxu0 0.0
  %356 = vmatpush1.msra.mxu0 0.0
  %357 = vmatprep.subr.mxu0 0.0
  %358 = vmatpush1.msra.mxu0 0.0
  %359 = vmatprep.subr.mxu0 0.0
  %360 = vmatpush1.msra.mxu0 0.0
  %361 = vmatprep.subr.mxu0 0.0
  %362 = vmatpush1.msra.mxu0 0.0
  %363 = vmatprep.subr.mxu0 0.0
  %364 = vmatpush1.msra.mxu0 0.0
  %365 = vmatprep.subr.mxu0 0.0
  %366 = vmatpush1.msra.mxu0 0.0
  %367 = vmatprep.subr.mxu0 0.0
  %368 = vmatpush1.msra.mxu0 0.0
  %369 = vmatprep.subr.mxu0 0.0
  %370 = vmatpush1.msra.mxu0 0.0
  %371 = vmatprep.subr.mxu0 0.0
  %372 = vmatpush1.msra.mxu0 0.0
  %373 = vmatprep.subr.mxu0 0.0
  %374 = vmatpush1.msra.mxu0 0.0
  %375 = vmatprep.subr.mxu0 0.0
  %376 = vmatpush1.msra.mxu0 0.0
  %377 = vmatprep.subr.mxu0 0.0
  %378 = vmatpush1.msra.mxu0 0.0
  %379 = vmatprep.subr.mxu0 0.0
  %380 = vmatpush1.msra.mxu0 0.0
  %381 = vmatprep.subr.mxu0 0.0
  %382 = vmatpush1.msra.mxu0 0.0
  %383 = vmatprep.subr.mxu0 0.0
  %384 = vmatpush1.msra.mxu0 0.0
  %385 = vmatprep.subr.mxu0 0.0
  %386 = vmatpush1.msra.mxu0 0.0
  %387 = vmatprep.subr.mxu0 0.0
  %388 = vmatpush1.msra.mxu0 0.0
  %389 = vmatprep.subr.mxu0 0.0
  %390 = vmatpush1.msra.mxu0 0.0
  %391 = vmatprep.subr.mxu0 0.0
  %392 = vmatpush1.msra.mxu0 0.0
  %393 = vmatprep.subr.mxu0 0.0
  %394 = vmatpush1.msra.mxu0 0.0
  %395 = vmatprep.subr.mxu0 0.0
  %396 = vmatpush1.msra.mxu0 0.0
  %397 = vmatprep.mubr.f32.mxu0 0.0
  %v398 = vand.u32 %v40, 4294901760
  %v399 = vsub.f32 %v40, %v398
  %400 = vmatmul.mubr.f32.gmra.mrb[0].mxu0 %v399
  %v401 = vpop.f32.mrb[0].mxu0
  %v402 = vadd.f32 %v286, %v401
  %v403 = vpop.f32.mrb[0].mxu0
  %404 = vmatprep.mubr.f32.mxu0 0.0
  %v405 = vand.u32 %v43, 4294901760
  %v406 = vsub.f32 %v43, %v405
  %407 = vmatmul.mubr.f32.gmra.mrb[0].mxu0 %v406
  %v408 = vpop.f32.mrb[0].mxu0
  %v409 = vadd.f32 %v292, %v408
  %v410 = vpop.f32.mrb[0].mxu0
  %411 = vmatprep.mubr.f32.mxu0 0.0
  %v412 = vand.u32 %v46, 4294901760
  %v413 = vsub.f32 %v46, %v412
  %414 = vmatmul.mubr.f32.gmra.mrb[0].mxu0 %v413
  %v415 = vpop.f32.mrb[0].mxu0
  %v416 = vadd.f32 %v298, %v415
  %v417 = vpop.f32.mrb[0].mxu0
  %418 = vmatprep.mubr.f32.mxu0 0.0
  %v419 = vand.u32 %v49, 4294901760
  %v420 = vsub.f32 %v49, %v419
  %421 = vmatmul.mubr.f32.gmra.mrb[0].mxu0 %v420
  %v422 = vpop.f32.mrb[0].mxu0
  %v423 = vadd.f32 %v304, %v422
  %v424 = vpop.f32.mrb[0].mxu0
  %425 = vmatprep.mubr.f32.mxu0 0.0
  %v426 = vand.u32 %v52, 4294901760
  %v427 = vsub.f32 %v52, %v426
  %428 = vmatmul.mubr.f32.gmra.mrb[0].mxu0 %v427
  %v429 = vpop.f32.mrb[0].mxu0
  %v430 = vadd.f32 %v310, %v429
  %v431 = vpop.f32.mrb[0].mxu0
  %432 = vmatprep.mubr.f32.mxu0 0.0
  %v433 = vand.u32 %v55, 4294901760
  %v434 = vsub.f32 %v55, %v433
  %435 = vmatmul.mubr.f32.gmra.mrb[0].mxu0 %v434
  %v436 = vpop.f32.mrb[0].mxu0
  %v437 = vadd.f32 %v316, %v436
  %v438 = vpop.f32.mrb[0].mxu0
  %439 = vmatprep.mubr.f32.mxu0 0.0
  %v440 = vand.u32 %v58, 4294901760
  %v441 = vsub.f32 %v58, %v440
  %442 = vmatmul.mubr.f32.gmra.mrb[0].mxu0 %v441
  %v443 = vpop.f32.mrb[0].mxu0
  %v444 = vadd.f32 %v322, %v443
  %v445 = vpop.f32.mrb[0].mxu0
  %446 = vmatprep.mubr.f32.mxu0 0.0
  %v447 = vand.u32 %v61, 4294901760
  %v448 = vsub.f32 %v61, %v447
  %449 = vmatmul.mubr.f32.gmra.mrb[0].mxu0 %v448
  %v450 = vpop.f32.mrb[0].mxu0
  %v451 = vadd.f32 %v328, %v450
  %v452 = vpop.f32.mrb[0].mxu0
  %453 = vdwg.mxu0
  %454 = vmatprep.subr.mxu0 0.0
  %v455 = vand.u32 %v65, 4294901760
  %456 = vmatpush1.msra.mxu0 %v455
  %457 = vmatprep.subr.mxu0 0.0
  %458 = vmatpush1.msra.mxu0 0.0
  %459 = vmatprep.subr.mxu0 0.0
  %460 = vmatpush1.msra.mxu0 0.0
  %461 = vmatprep.subr.mxu0 0.0
  %462 = vmatpush1.msra.mxu0 0.0
  %463 = vmatprep.subr.mxu0 0.0
  %464 = vmatpush1.msra.mxu0 0.0
  %465 = vmatprep.subr.mxu0 0.0
  %466 = vmatpush1.msra.mxu0 0.0
  %467 = vmatprep.subr.mxu0 0.0
  %468 = vmatpush1.msra.mxu0 0.0
  %469 = vmatprep.subr.mxu0 0.0
  %470 = vmatpush1.msra.mxu0 0.0
  %471 = vmatprep.subr.mxu0 0.0
  %472 = vmatpush1.msra.mxu0 0.0
  %473 = vmatprep.subr.mxu0 0.0
  %474 = vmatpush1.msra.mxu0 0.0
  %475 = vmatprep.subr.mxu0 0.0
  %476 = vmatpush1.msra.mxu0 0.0
  %477 = vmatprep.subr.mxu0 0.0
  %478 = vmatpush1.msra.mxu0 0.0
  %479 = vmatprep.subr.mxu0 0.0
  %480 = vmatpush1.msra.mxu0 0.0
  %481 = vmatprep.subr.mxu0 0.0
  %482 = vmatpush1.msra.mxu0 0.0
  %483 = vmatprep.subr.mxu0 0.0
  %484 = vmatpush1.msra.mxu0 0.0
  %485 = vmatprep.subr.mxu0 0.0
  %486 = vmatpush1.msra.mxu0 0.0
  %487 = vmatprep.subr.mxu0 0.0
  %488 = vmatpush1.msra.mxu0 0.0
  %489 = vmatprep.subr.mxu0 0.0
  %490 = vmatpush1.msra.mxu0 0.0
  %491 = vmatprep.subr.mxu0 0.0
  %492 = vmatpush1.msra.mxu0 0.0
  %493 = vmatprep.subr.mxu0 0.0
  %494 = vmatpush1.msra.mxu0 0.0
  %495 = vmatprep.subr.mxu0 0.0
  %496 = vmatpush1.msra.mxu0 0.0
  %497 = vmatprep.subr.mxu0 0.0
  %498 = vmatpush1.msra.mxu0 0.0
  %499 = vmatprep.subr.mxu0 0.0
  %500 = vmatpush1.msra.mxu0 0.0
  %501 = vmatprep.subr.mxu0 0.0
  %502 = vmatpush1.msra.mxu0 0.0
  %503 = vmatprep.subr.mxu0 0.0
  %504 = vmatpush1.msra.mxu0 0.0
  %505 = vmatprep.subr.mxu0 0.0
  %506 = vmatpush1.msra.mxu0 0.0
  %507 = vmatprep.subr.mxu0 0.0
  %508 = vmatpush1.msra.mxu0 0.0
  %509 = vmatprep.subr.mxu0 0.0
  %510 = vmatpush1.msra.mxu0 0.0
  %511 = vmatprep.subr.mxu0 0.0
  %512 = vmatpush1.msra.mxu0 0.0
  %513 = vmatprep.subr.mxu0 0.0
  %514 = vmatpush1.msra.mxu0 0.0
  %515 = vmatprep.subr.mxu0 0.0
  %516 = vmatpush1.msra.mxu0 0.0
  %517 = vmatprep.subr.mxu0 0.0
  %518 = vmatpush1.msra.mxu0 0.0
  %519 = vmatprep.mubr.f32.mxu0 0.0
  %v520 = vand.u32 %v40, 4294901760
  %v521 = vsub.f32 %v40, %v520
  %v522 = vand.u32 %v521, 4294901760
  %523 = vmatmul.mubr.f32.gmra.mrb[0].mxu0 %v522
  %v524 = vpop.f32.mrb[0].mxu0
  %v525 = vadd.f32 %v402, %v524
  %v526 = vpop.f32.mrb[0].mxu0
  %527 = vmatprep.mubr.f32.mxu0 0.0
  %v528 = vand.u32 %v43, 4294901760
  %v529 = vsub.f32 %v43, %v528
  %v530 = vand.u32 %v529, 4294901760
  %531 = vmatmul.mubr.f32.gmra.mrb[0].mxu0 %v530
  %v532 = vpop.f32.mrb[0].mxu0
  %v533 = vadd.f32 %v409, %v532
  %v534 = vpop.f32.mrb[0].mxu0
  %535 = vmatprep.mubr.f32.mxu0 0.0
  %v536 = vand.u32 %v46, 4294901760
  %v537 = vsub.f32 %v46, %v536
  %v538 = vand.u32 %v537, 4294901760
  %539 = vmatmul.mubr.f32.gmra.mrb[0].mxu0 %v538
  %v540 = vpop.f32.mrb[0].mxu0
  %v541 = vadd.f32 %v416, %v540
  %v542 = vpop.f32.mrb[0].mxu0
  %543 = vmatprep.mubr.f32.mxu0 0.0
  %v544 = vand.u32 %v49, 4294901760
  %v545 = vsub.f32 %v49, %v544
  %v546 = vand.u32 %v545, 4294901760
  %547 = vmatmul.mubr.f32.gmra.mrb[0].mxu0 %v546
  %v548 = vpop.f32.mrb[0].mxu0
  %v549 = vadd.f32 %v423, %v548
  %v550 = vpop.f32.mrb[0].mxu0
  %551 = vmatprep.mubr.f32.mxu0 0.0
  %v552 = vand.u32 %v52, 4294901760
  %v553 = vsub.f32 %v52, %v552
  %v554 = vand.u32 %v553, 4294901760
  %555 = vmatmul.mubr.f32.gmra.mrb[0].mxu0 %v554
  %v556 = vpop.f32.mrb[0].mxu0
  %v557 = vadd.f32 %v430, %v556
  %v558 = vpop.f32.mrb[0].mxu0
  %559 = vmatprep.mubr.f32.mxu0 0.0
  %v560 = vand.u32 %v55, 4294901760
  %v561 = vsub.f32 %v55, %v560
  %v562 = vand.u32 %v561, 4294901760
  %563 = vmatmul.mubr.f32.gmra.mrb[0].mxu0 %v562
  %v564 = vpop.f32.mrb[0].mxu0
  %v565 = vadd.f32 %v437, %v564
  %v566 = vpop.f32.mrb[0].mxu0
  %567 = vmatprep.mubr.f32.mxu0 0.0
  %v568 = vand.u32 %v58, 4294901760
  %v569 = vsub.f32 %v58, %v568
  %v570 = vand.u32 %v569, 4294901760
  %571 = vmatmul.mubr.f32.gmra.mrb[0].mxu0 %v570
  %v572 = vpop.f32.mrb[0].mxu0
  %v573 = vadd.f32 %v444, %v572
  %v574 = vpop.f32.mrb[0].mxu0
  %575 = vmatprep.mubr.f32.mxu0 0.0
  %v576 = vand.u32 %v61, 4294901760
  %v577 = vsub.f32 %v61, %v576
  %v578 = vand.u32 %v577, 4294901760
  %579 = vmatmul.mubr.f32.gmra.mrb[0].mxu0 %v578
  %v580 = vpop.f32.mrb[0].mxu0
  %v581 = vadd.f32 %v451, %v580
  %v582 = vpop.f32.mrb[0].mxu0
  %583 = vdwg.mxu0
  %584 = vmatprep.subr.mxu0 0.0
  %v585 = vand.u32 %v65, 4294901760
  %v586 = vsub.f32 %v65, %v585
  %v587 = vand.u32 %v586, 4294901760
  %588 = vmatpush1.msra.mxu0 %v587
  %589 = vmatprep.subr.mxu0 0.0
  %590 = vmatpush1.msra.mxu0 0.0
  %591 = vmatprep.subr.mxu0 0.0
  %592 = vmatpush1.msra.mxu0 0.0
  %593 = vmatprep.subr.mxu0 0.0
  %594 = vmatpush1.msra.mxu0 0.0
  %595 = vmatprep.subr.mxu0 0.0
  %596 = vmatpush1.msra.mxu0 0.0
  %597 = vmatprep.subr.mxu0 0.0
  %598 = vmatpush1.msra.mxu0 0.0
  %599 = vmatprep.subr.mxu0 0.0
  %600 = vmatpush1.msra.mxu0 0.0
  %601 = vmatprep.subr.mxu0 0.0
  %602 = vmatpush1.msra.mxu0 0.0
  %603 = vmatprep.subr.mxu0 0.0
  %604 = vmatpush1.msra.mxu0 0.0
  %605 = vmatprep.subr.mxu0 0.0
  %606 = vmatpush1.msra.mxu0 0.0
  %607 = vmatprep.subr.mxu0 0.0
  %608 = vmatpush1.msra.mxu0 0.0
  %609 = vmatprep.subr.mxu0 0.0
  %610 = vmatpush1.msra.mxu0 0.0
  %611 = vmatprep.subr.mxu0 0.0
  %612 = vmatpush1.msra.mxu0 0.0
  %613 = vmatprep.subr.mxu0 0.0
  %614 = vmatpush1.msra.mxu0 0.0
  %615 = vmatprep.subr.mxu0 0.0
  %616 = vmatpush1.msra.mxu0 0.0
  %617 = vmatprep.subr.mxu0 0.0
  %618 = vmatpush1.msra.mxu0 0.0
  %619 = vmatprep.subr.mxu0 0.0
  %620 = vmatpush1.msra.mxu0 0.0
  %621 = vmatprep.subr.mxu0 0.0
  %622 = vmatpush1.msra.mxu0 0.0
  %623 = vmatprep.subr.mxu0 0.0
  %624 = vmatpush1.msra.mxu0 0.0
  %625 = vmatprep.subr.mxu0 0.0
  %626 = vmatpush1.msra.mxu0 0.0
  %627 = vmatprep.subr.mxu0 0.0
  %628 = vmatpush1.msra.mxu0 0.0
  %629 = vmatprep.subr.mxu0 0.0
  %630 = vmatpush1.msra.mxu0 0.0
  %631 = vmatprep.subr.mxu0 0.0
  %632 = vmatpush1.msra.mxu0 0.0
  %633 = vmatprep.subr.mxu0 0.0
  %634 = vmatpush1.msra.mxu0 0.0
  %635 = vmatprep.subr.mxu0 0.0
  %636 = vmatpush1.msra.mxu0 0.0
  %637 = vmatprep.subr.mxu0 0.0
  %638 = vmatpush1.msra.mxu0 0.0
  %639 = vmatprep.subr.mxu0 0.0
  %640 = vmatpush1.msra.mxu0 0.0
  %641 = vmatprep.subr.mxu0 0.0
  %642 = vmatpush1.msra.mxu0 0.0
  %643 = vmatprep.subr.mxu0 0.0
  %644 = vmatpush1.msra.mxu0 0.0
  %645 = vmatprep.subr.mxu0 0.0
  %646 = vmatpush1.msra.mxu0 0.0
  %647 = vmatprep.subr.mxu0 0.0
  %648 = vmatpush1.msra.mxu0 0.0
  %649 = vmatprep.subr.mxu0 0.0
  %650 = vmatpush1.msra.mxu0 0.0
  %651 = vmatprep.mubr.f32.mxu0 0.0
  %v652 = vand.u32 %v40, 4294901760
  %653 = vmatmul.mubr.f32.gmra.mrb[0].mxu0 %v652
  %v654 = vpop.f32.mrb[0].mxu0
  %v655 = vadd.f32 %v525, %v654
  %v656 = vpop.f32.mrb[0].mxu0
  %657 = vmatprep.mubr.f32.mxu0 0.0
  %v658 = vand.u32 %v43, 4294901760
  %659 = vmatmul.mubr.f32.gmra.mrb[0].mxu0 %v658
  %v660 = vpop.f32.mrb[0].mxu0
  %v661 = vadd.f32 %v533, %v660
  %v662 = vpop.f32.mrb[0].mxu0
  %663 = vmatprep.mubr.f32.mxu0 0.0
  %v664 = vand.u32 %v46, 4294901760
  %665 = vmatmul.mubr.f32.gmra.mrb[0].mxu0 %v664
  %v666 = vpop.f32.mrb[0].mxu0
  %v667 = vadd.f32 %v541, %v666
  %v668 = vpop.f32.mrb[0].mxu0
  %669 = vmatprep.mubr.f32.mxu0 0.0
  %v670 = vand.u32 %v49, 4294901760
  %671 = vmatmul.mubr.f32.gmra.mrb[0].mxu0 %v670
  %v672 = vpop.f32.mrb[0].mxu0
  %v673 = vadd.f32 %v549, %v672
  %v674 = vpop.f32.mrb[0].mxu0
  %675 = vmatprep.mubr.f32.mxu0 0.0
  %v676 = vand.u32 %v52, 4294901760
  %677 = vmatmul.mubr.f32.gmra.mrb[0].mxu0 %v676
  %v678 = vpop.f32.mrb[0].mxu0
  %v679 = vadd.f32 %v557, %v678
  %v680 = vpop.f32.mrb[0].mxu0
  %681 = vmatprep.mubr.f32.mxu0 0.0
  %v682 = vand.u32 %v55, 4294901760
  %683 = vmatmul.mubr.f32.gmra.mrb[0].mxu0 %v682
  %v684 = vpop.f32.mrb[0].mxu0
  %v685 = vadd.f32 %v565, %v684
  %v686 = vpop.f32.mrb[0].mxu0
  %687 = vmatprep.mubr.f32.mxu0 0.0
  %v688 = vand.u32 %v58, 4294901760
  %689 = vmatmul.mubr.f32.gmra.mrb[0].mxu0 %v688
  %v690 = vpop.f32.mrb[0].mxu0
  %v691 = vadd.f32 %v573, %v690
  %v692 = vpop.f32.mrb[0].mxu0
  %693 = vmatprep.mubr.f32.mxu0 0.0
  %v694 = vand.u32 %v61, 4294901760
  %695 = vmatmul.mubr.f32.gmra.mrb[0].mxu0 %v694
  %v696 = vpop.f32.mrb[0].mxu0
  %v697 = vadd.f32 %v581, %v696
  %v698 = vpop.f32.mrb[0].mxu0
  %699 = vdwg.mxu0
  %700 = vmatprep.subr.mxu0 0.0
  %v701 = vand.u32 %v65, 4294901760
  %702 = vmatpush1.msra.mxu0 %v701
  %703 = vmatprep.subr.mxu0 0.0
  %704 = vmatpush1.msra.mxu0 0.0
  %705 = vmatprep.subr.mxu0 0.0
  %706 = vmatpush1.msra.mxu0 0.0
  %707 = vmatprep.subr.mxu0 0.0
  %708 = vmatpush1.msra.mxu0 0.0
  %709 = vmatprep.subr.mxu0 0.0
  %710 = vmatpush1.msra.mxu0 0.0
  %711 = vmatprep.subr.mxu0 0.0
  %712 = vmatpush1.msra.mxu0 0.0
  %713 = vmatprep.subr.mxu0 0.0
  %714 = vmatpush1.msra.mxu0 0.0
  %715 = vmatprep.subr.mxu0 0.0
  %716 = vmatpush1.msra.mxu0 0.0
  %717 = vmatprep.subr.mxu0 0.0
  %718 = vmatpush1.msra.mxu0 0.0
  %719 = vmatprep.subr.mxu0 0.0
  %720 = vmatpush1.msra.mxu0 0.0
  %721 = vmatprep.subr.mxu0 0.0
  %722 = vmatpush1.msra.mxu0 0.0
  %723 = vmatprep.subr.mxu0 0.0
  %724 = vmatpush1.msra.mxu0 0.0
  %725 = vmatprep.subr.mxu0 0.0
  %726 = vmatpush1.msra.mxu0 0.0
  %727 = vmatprep.subr.mxu0 0.0
  %728 = vmatpush1.msra.mxu0 0.0
  %729 = vmatprep.subr.mxu0 0.0
  %730 = vmatpush1.msra.mxu0 0.0
  %731 = vmatprep.subr.mxu0 0.0
  %732 = vmatpush1.msra.mxu0 0.0
  %733 = vmatprep.subr.mxu0 0.0
  %734 = vmatpush1.msra.mxu0 0.0
  %735 = vmatprep.subr.mxu0 0.0
  %736 = vmatpush1.msra.mxu0 0.0
  %737 = vmatprep.subr.mxu0 0.0
  %738 = vmatpush1.msra.mxu0 0.0
  %739 = vmatprep.subr.mxu0 0.0
  %740 = vmatpush1.msra.mxu0 0.0
  %741 = vmatprep.subr.mxu0 0.0
  %742 = vmatpush1.msra.mxu0 0.0
  %743 = vmatprep.subr.mxu0 0.0
  %744 = vmatpush1.msra.mxu0 0.0
  %745 = vmatprep.subr.mxu0 0.0
  %746 = vmatpush1.msra.mxu0 0.0
  %747 = vmatprep.subr.mxu0 0.0
  %748 = vmatpush1.msra.mxu0 0.0
  %749 = vmatprep.subr.mxu0 0.0
  %750 = vmatpush1.msra.mxu0 0.0
  %751 = vmatprep.subr.mxu0 0.0
  %752 = vmatpush1.msra.mxu0 0.0
  %753 = vmatprep.subr.mxu0 0.0
  %754 = vmatpush1.msra.mxu0 0.0
  %755 = vmatprep.subr.mxu0 0.0
  %756 = vmatpush1.msra.mxu0 0.0
  %757 = vmatprep.subr.mxu0 0.0
  %758 = vmatpush1.msra.mxu0 0.0
  %759 = vmatprep.subr.mxu0 0.0
  %760 = vmatpush1.msra.mxu0 0.0
  %761 = vmatprep.subr.mxu0 0.0
  %762 = vmatpush1.msra.mxu0 0.0
  %763 = vmatprep.subr.mxu0 0.0
  %764 = vmatpush1.msra.mxu0 0.0
  %765 = vmatprep.mubr.f32.mxu0 0.0
  %v766 = vand.u32 %v40, 4294901760
  %767 = vmatmul.mubr.f32.gmra.mrb[0].mxu0 %v766
  %v768 = vpop.f32.mrb[0].mxu0
  %v769 = vadd.f32 %v655, %v768
  %v770 = vpop.f32.mrb[0].mxu0
  %771 = vmatprep.mubr.f32.mxu0 0.0
  %v772 = vand.u32 %v43, 4294901760
  %773 = vmatmul.mubr.f32.gmra.mrb[0].mxu0 %v772
  %v774 = vpop.f32.mrb[0].mxu0
  %v775 = vadd.f32 %v661, %v774
  %v776 = vpop.f32.mrb[0].mxu0
  %777 = vmatprep.mubr.f32.mxu0 0.0
  %v778 = vand.u32 %v46, 4294901760
  %779 = vmatmul.mubr.f32.gmra.mrb[0].mxu0 %v778
  %v780 = vpop.f32.mrb[0].mxu0
  %v781 = vadd.f32 %v667, %v780
  %v782 = vpop.f32.mrb[0].mxu0
  %783 = vmatprep.mubr.f32.mxu0 0.0
  %v784 = vand.u32 %v49, 4294901760
  %785 = vmatmul.mubr.f32.gmra.mrb[0].mxu0 %v784
  %v786 = vpop.f32.mrb[0].mxu0
  %v787 = vadd.f32 %v673, %v786
  %v788 = vpop.f32.mrb[0].mxu0
  %789 = vmatprep.mubr.f32.mxu0 0.0
  %v790 = vand.u32 %v52, 4294901760
  %791 = vmatmul.mubr.f32.gmra.mrb[0].mxu0 %v790
  %v792 = vpop.f32.mrb[0].mxu0
  %v793 = vadd.f32 %v679, %v792
  %v794 = vpop.f32.mrb[0].mxu0
  %795 = vmatprep.mubr.f32.mxu0 0.0
  %v796 = vand.u32 %v55, 4294901760
  %797 = vmatmul.mubr.f32.gmra.mrb[0].mxu0 %v796
  %v798 = vpop.f32.mrb[0].mxu0
  %v799 = vadd.f32 %v685, %v798
  %v800 = vpop.f32.mrb[0].mxu0
  %801 = vmatprep.mubr.f32.mxu0 0.0
  %v802 = vand.u32 %v58, 4294901760
  %803 = vmatmul.mubr.f32.gmra.mrb[0].mxu0 %v802
  %v804 = vpop.f32.mrb[0].mxu0
  %v805 = vadd.f32 %v691, %v804
  %v806 = vpop.f32.mrb[0].mxu0
  %807 = vmatprep.mubr.f32.mxu0 0.0
  %v808 = vand.u32 %v61, 4294901760
  %809 = vmatmul.mubr.f32.gmra.mrb[0].mxu0 %v808
  %v810 = vpop.f32.mrb[0].mxu0
  %v811 = vadd.f32 %v697, %v810
  %v812 = vpop.f32.mrb[0].mxu0
  %813 = vdwg.mxu0
  %vm814 = vcmask 130048
  %815 = vst.msk [vmem:[%s5] sm:$0xff] %vm814, %v769
  %816 = vst.msk [vmem:[%s5 + $0x8] sm:$0xff] %vm814, %v775
  %817 = vst.msk [vmem:[%s5 + $0x10] sm:$0xff] %vm814, %v781
  %818 = vst.msk [vmem:[%s5 + $0x18] sm:$0xff] %vm814, %v787
  %819 = vst.msk [vmem:[%s5 + $0x20] sm:$0xff] %vm814, %v793
  %820 = vst.msk [vmem:[%s5 + $0x28] sm:$0xff] %vm814, %v799
  %821 = vst.msk [vmem:[%s5 + $0x30] sm:$0xff] %vm814, %v805
  %822 = vst.msk [vmem:[%s5 + $0x38] sm:$0xff] %vm814, %v811
  %v823 = vld [vmem:[%s3] sm:$0x3f]
  %v824 = vld [vmem:[%s4] sm:$0x1]
  %v826 = vlaneseq
  %v827 = vshrl.u32 %v826, 7
  %v828 = vsub.s32 0, %v827
  %v829 = vrot.slane %v824, %v828
  %v832 = vsel %vm63, %v823, 0
  %834 = vmatprep.subr.mxu0 0.0
  %v835 = vand.u32 %v832, 4294901760
  %836 = vmatpush1.msra.mxu0 %v835
  %837 = vmatprep.subr.mxu0 0.0
  %838 = vmatpush1.msra.mxu0 0.0
  %839 = vmatprep.subr.mxu0 0.0
  %840 = vmatpush1.msra.mxu0 0.0
  %841 = vmatprep.subr.mxu0 0.0
  %842 = vmatpush1.msra.mxu0 0.0
  %843 = vmatprep.subr.mxu0 0.0
  %844 = vmatpush1.msra.mxu0 0.0
  %845 = vmatprep.subr.mxu0 0.0
  %846 = vmatpush1.msra.mxu0 0.0
  %847 = vmatprep.subr.mxu0 0.0
  %848 = vmatpush1.msra.mxu0 0.0
  %849 = vmatprep.subr.mxu0 0.0
  %850 = vmatpush1.msra.mxu0 0.0
  %851 = vmatprep.subr.mxu0 0.0
  %852 = vmatpush1.msra.mxu0 0.0
  %853 = vmatprep.subr.mxu0 0.0
  %854 = vmatpush1.msra.mxu0 0.0
  %855 = vmatprep.subr.mxu0 0.0
  %856 = vmatpush1.msra.mxu0 0.0
  %857 = vmatprep.subr.mxu0 0.0
  %858 = vmatpush1.msra.mxu0 0.0
  %859 = vmatprep.subr.mxu0 0.0
  %860 = vmatpush1.msra.mxu0 0.0
  %861 = vmatprep.subr.mxu0 0.0
  %862 = vmatpush1.msra.mxu0 0.0
  %863 = vmatprep.subr.mxu0 0.0
  %864 = vmatpush1.msra.mxu0 0.0
  %865 = vmatprep.subr.mxu0 0.0
  %866 = vmatpush1.msra.mxu0 0.0
  %867 = vmatprep.subr.mxu0 0.0
  %868 = vmatpush1.msra.mxu0 0.0
  %869 = vmatprep.subr.mxu0 0.0
  %870 = vmatpush1.msra.mxu0 0.0
  %871 = vmatprep.subr.mxu0 0.0
  %872 = vmatpush1.msra.mxu0 0.0
  %873 = vmatprep.subr.mxu0 0.0
  %874 = vmatpush1.msra.mxu0 0.0
  %875 = vmatprep.subr.mxu0 0.0
  %876 = vmatpush1.msra.mxu0 0.0
  %877 = vmatprep.subr.mxu0 0.0
  %878 = vmatpush1.msra.mxu0 0.0
  %879 = vmatprep.subr.mxu0 0.0
  %880 = vmatpush1.msra.mxu0 0.0
  %881 = vmatprep.subr.mxu0 0.0
  %882 = vmatpush1.msra.mxu0 0.0
  %883 = vmatprep.subr.mxu0 0.0
  %884 = vmatpush1.msra.mxu0 0.0
  %885 = vmatprep.subr.mxu0 0.0
  %886 = vmatpush1.msra.mxu0 0.0
  %887 = vmatprep.subr.mxu0 0.0
  %888 = vmatpush1.msra.mxu0 0.0
  %889 = vmatprep.subr.mxu0 0.0
  %890 = vmatpush1.msra.mxu0 0.0
  %891 = vmatprep.subr.mxu0 0.0
  %892 = vmatpush1.msra.mxu0 0.0
  %893 = vmatprep.subr.mxu0 0.0
  %894 = vmatpush1.msra.mxu0 0.0
  %895 = vmatprep.subr.mxu0 0.0
  %896 = vmatpush1.msra.mxu0 0.0
  %897 = vmatprep.subr.mxu0 0.0
  %898 = vmatpush1.msra.mxu0 0.0
  %899 = vmatprep.mubr.f32.mxu0 0.0
  %v900 = vand.u32 %v40, 4294901760
  %v901 = vsub.f32 %v40, %v900
  %v902 = vand.u32 %v901, 4294901760
  %v903 = vsub.f32 %v901, %v902
  %v904 = vand.u32 %v903, 4294901760
  %905 = vmatmul.mubr.f32.gmra.mrb[0].mxu0 %v904
  %v906 = vpop.f32.mrb[0].mxu0
  %v907 = vadd.f32 %v829, %v906
  %v908 = vpop.f32.mrb[0].mxu0
  %909 = vmatprep.mubr.f32.mxu0 0.0
  %v910 = vand.u32 %v43, 4294901760
  %v911 = vsub.f32 %v43, %v910
  %v912 = vand.u32 %v911, 4294901760
  %v913 = vsub.f32 %v911, %v912
  %v914 = vand.u32 %v913, 4294901760
  %915 = vmatmul.mubr.f32.gmra.mrb[0].mxu0 %v914
  %v916 = vpop.f32.mrb[0].mxu0
  %v917 = vadd.f32 %v829, %v916
  %v918 = vpop.f32.mrb[0].mxu0
  %919 = vmatprep.mubr.f32.mxu0 0.0
  %v920 = vand.u32 %v46, 4294901760
  %v921 = vsub.f32 %v46, %v920
  %v922 = vand.u32 %v921, 4294901760
  %v923 = vsub.f32 %v921, %v922
  %v924 = vand.u32 %v923, 4294901760
  %925 = vmatmul.mubr.f32.gmra.mrb[0].mxu0 %v924
  %v926 = vpop.f32.mrb[0].mxu0
  %v927 = vadd.f32 %v829, %v926
  %v928 = vpop.f32.mrb[0].mxu0
  %929 = vmatprep.mubr.f32.mxu0 0.0
  %v930 = vand.u32 %v49, 4294901760
  %v931 = vsub.f32 %v49, %v930
  %v932 = vand.u32 %v931, 4294901760
  %v933 = vsub.f32 %v931, %v932
  %v934 = vand.u32 %v933, 4294901760
  %935 = vmatmul.mubr.f32.gmra.mrb[0].mxu0 %v934
  %v936 = vpop.f32.mrb[0].mxu0
  %v937 = vadd.f32 %v829, %v936
  %v938 = vpop.f32.mrb[0].mxu0
  %939 = vmatprep.mubr.f32.mxu0 0.0
  %v940 = vand.u32 %v52, 4294901760
  %v941 = vsub.f32 %v52, %v940
  %v942 = vand.u32 %v941, 4294901760
  %v943 = vsub.f32 %v941, %v942
  %v944 = vand.u32 %v943, 4294901760
  %945 = vmatmul.mubr.f32.gmra.mrb[0].mxu0 %v944
  %v946 = vpop.f32.mrb[0].mxu0
  %v947 = vadd.f32 %v829, %v946
  %v948 = vpop.f32.mrb[0].mxu0
  %949 = vmatprep.mubr.f32.mxu0 0.0
  %v950 = vand.u32 %v55, 4294901760
  %v951 = vsub.f32 %v55, %v950
  %v952 = vand.u32 %v951, 4294901760
  %v953 = vsub.f32 %v951, %v952
  %v954 = vand.u32 %v953, 4294901760
  %955 = vmatmul.mubr.f32.gmra.mrb[0].mxu0 %v954
  %v956 = vpop.f32.mrb[0].mxu0
  %v957 = vadd.f32 %v829, %v956
  %v958 = vpop.f32.mrb[0].mxu0
  %959 = vmatprep.mubr.f32.mxu0 0.0
  %v960 = vand.u32 %v58, 4294901760
  %v961 = vsub.f32 %v58, %v960
  %v962 = vand.u32 %v961, 4294901760
  %v963 = vsub.f32 %v961, %v962
  %v964 = vand.u32 %v963, 4294901760
  %965 = vmatmul.mubr.f32.gmra.mrb[0].mxu0 %v964
  %v966 = vpop.f32.mrb[0].mxu0
  %v967 = vadd.f32 %v829, %v966
  %v968 = vpop.f32.mrb[0].mxu0
  %969 = vmatprep.mubr.f32.mxu0 0.0
  %v970 = vand.u32 %v61, 4294901760
  %v971 = vsub.f32 %v61, %v970
  %v972 = vand.u32 %v971, 4294901760
  %v973 = vsub.f32 %v971, %v972
  %v974 = vand.u32 %v973, 4294901760
  %975 = vmatmul.mubr.f32.gmra.mrb[0].mxu0 %v974
  %v976 = vpop.f32.mrb[0].mxu0
  %v977 = vadd.f32 %v829, %v976
  %v978 = vpop.f32.mrb[0].mxu0
  %979 = vdwg.mxu0
  %980 = vmatprep.subr.mxu0 0.0
  %v981 = vand.u32 %v832, 4294901760
  %v982 = vsub.f32 %v832, %v981
  %v983 = vand.u32 %v982, 4294901760
  %v984 = vsub.f32 %v982, %v983
  %v985 = vand.u32 %v984, 4294901760
  %986 = vmatpush1.msra.mxu0 %v985
  %987 = vmatprep.subr.mxu0 0.0
  %988 = vmatpush1.msra.mxu0 0.0
  %989 = vmatprep.subr.mxu0 0.0
  %990 = vmatpush1.msra.mxu0 0.0
  %991 = vmatprep.subr.mxu0 0.0
  %992 = vmatpush1.msra.mxu0 0.0
  %993 = vmatprep.subr.mxu0 0.0
  %994 = vmatpush1.msra.mxu0 0.0
  %995 = vmatprep.subr.mxu0 0.0
  %996 = vmatpush1.msra.mxu0 0.0
  %997 = vmatprep.subr.mxu0 0.0
  %998 = vmatpush1.msra.mxu0 0.0
  %999 = vmatprep.subr.mxu0 0.0
  %1000 = vmatpush1.msra.mxu0 0.0
  %1001 = vmatprep.subr.mxu0 0.0
  %1002 = vmatpush1.msra.mxu0 0.0
  %1003 = vmatprep.subr.mxu0 0.0
  %1004 = vmatpush1.msra.mxu0 0.0
  %1005 = vmatprep.subr.mxu0 0.0
  %1006 = vmatpush1.msra.mxu0 0.0
  %1007 = vmatprep.subr.mxu0 0.0
  %1008 = vmatpush1.msra.mxu0 0.0
  %1009 = vmatprep.subr.mxu0 0.0
  %1010 = vmatpush1.msra.mxu0 0.0
  %1011 = vmatprep.subr.mxu0 0.0
  %1012 = vmatpush1.msra.mxu0 0.0
  %1013 = vmatprep.subr.mxu0 0.0
  %1014 = vmatpush1.msra.mxu0 0.0
  %1015 = vmatprep.subr.mxu0 0.0
  %1016 = vmatpush1.msra.mxu0 0.0
  %1017 = vmatprep.subr.mxu0 0.0
  %1018 = vmatpush1.msra.mxu0 0.0
  %1019 = vmatprep.subr.mxu0 0.0
  %1020 = vmatpush1.msra.mxu0 0.0
  %1021 = vmatprep.subr.mxu0 0.0
  %1022 = vmatpush1.msra.mxu0 0.0
  %1023 = vmatprep.subr.mxu0 0.0
  %1024 = vmatpush1.msra.mxu0 0.0
  %1025 = vmatprep.subr.mxu0 0.0
  %1026 = vmatpush1.msra.mxu0 0.0
  %1027 = vmatprep.subr.mxu0 0.0
  %1028 = vmatpush1.msra.mxu0 0.0
  %1029 = vmatprep.subr.mxu0 0.0
  %1030 = vmatpush1.msra.mxu0 0.0
  %1031 = vmatprep.subr.mxu0 0.0
  %1032 = vmatpush1.msra.mxu0 0.0
  %1033 = vmatprep.subr.mxu0 0.0
  %1034 = vmatpush1.msra.mxu0 0.0
  %1035 = vmatprep.subr.mxu0 0.0
  %1036 = vmatpush1.msra.mxu0 0.0
  %1037 = vmatprep.subr.mxu0 0.0
  %1038 = vmatpush1.msra.mxu0 0.0
  %1039 = vmatprep.subr.mxu0 0.0
  %1040 = vmatpush1.msra.mxu0 0.0
  %1041 = vmatprep.subr.mxu0 0.0
  %1042 = vmatpush1.msra.mxu0 0.0
  %1043 = vmatprep.subr.mxu0 0.0
  %1044 = vmatpush1.msra.mxu0 0.0
  %1045 = vmatprep.subr.mxu0 0.0
  %1046 = vmatpush1.msra.mxu0 0.0
  %1047 = vmatprep.subr.mxu0 0.0
  %1048 = vmatpush1.msra.mxu0 0.0
  %1049 = vmatprep.mubr.f32.mxu0 0.0
  %v1050 = vand.u32 %v40, 4294901760
  %1051 = vmatmul.mubr.f32.gmra.mrb[0].mxu0 %v1050
  %v1052 = vpop.f32.mrb[0].mxu0
  %v1053 = vadd.f32 %v907, %v1052
  %v1054 = vpop.f32.mrb[0].mxu0
  %1055 = vmatprep.mubr.f32.mxu0 0.0
  %v1056 = vand.u32 %v43, 4294901760
  %1057 = vmatmul.mubr.f32.gmra.mrb[0].mxu0 %v1056
  %v1058 = vpop.f32.mrb[0].mxu0
  %v1059 = vadd.f32 %v917, %v1058
  %v1060 = vpop.f32.mrb[0].mxu0
  %1061 = vmatprep.mubr.f32.mxu0 0.0
  %v1062 = vand.u32 %v46, 4294901760
  %1063 = vmatmul.mubr.f32.gmra.mrb[0].mxu0 %v1062
  %v1064 = vpop.f32.mrb[0].mxu0
  %v1065 = vadd.f32 %v927, %v1064
  %v1066 = vpop.f32.mrb[0].mxu0
  %1067 = vmatprep.mubr.f32.mxu0 0.0
  %v1068 = vand.u32 %v49, 4294901760
  %1069 = vmatmul.mubr.f32.gmra.mrb[0].mxu0 %v1068
  %v1070 = vpop.f32.mrb[0].mxu0
  %v1071 = vadd.f32 %v937, %v1070
  %v1072 = vpop.f32.mrb[0].mxu0
  %1073 = vmatprep.mubr.f32.mxu0 0.0
  %v1074 = vand.u32 %v52, 4294901760
  %1075 = vmatmul.mubr.f32.gmra.mrb[0].mxu0 %v1074
  %v1076 = vpop.f32.mrb[0].mxu0
  %v1077 = vadd.f32 %v947, %v1076
  %v1078 = vpop.f32.mrb[0].mxu0
  %1079 = vmatprep.mubr.f32.mxu0 0.0
  %v1080 = vand.u32 %v55, 4294901760
  %1081 = vmatmul.mubr.f32.gmra.mrb[0].mxu0 %v1080
  %v1082 = vpop.f32.mrb[0].mxu0
  %v1083 = vadd.f32 %v957, %v1082
  %v1084 = vpop.f32.mrb[0].mxu0
  %1085 = vmatprep.mubr.f32.mxu0 0.0
  %v1086 = vand.u32 %v58, 4294901760
  %1087 = vmatmul.mubr.f32.gmra.mrb[0].mxu0 %v1086
  %v1088 = vpop.f32.mrb[0].mxu0
  %v1089 = vadd.f32 %v967, %v1088
  %v1090 = vpop.f32.mrb[0].mxu0
  %1091 = vmatprep.mubr.f32.mxu0 0.0
  %v1092 = vand.u32 %v61, 4294901760
  %1093 = vmatmul.mubr.f32.gmra.mrb[0].mxu0 %v1092
  %v1094 = vpop.f32.mrb[0].mxu0
  %v1095 = vadd.f32 %v977, %v1094
  %v1096 = vpop.f32.mrb[0].mxu0
  %1097 = vdwg.mxu0
  %1098 = vmatprep.subr.mxu0 0.0
  %v1099 = vand.u32 %v832, 4294901760
  %v1100 = vsub.f32 %v832, %v1099
  %1101 = vmatpush1.msra.mxu0 %v1100
  %1102 = vmatprep.subr.mxu0 0.0
  %1103 = vmatpush1.msra.mxu0 0.0
  %1104 = vmatprep.subr.mxu0 0.0
  %1105 = vmatpush1.msra.mxu0 0.0
  %1106 = vmatprep.subr.mxu0 0.0
  %1107 = vmatpush1.msra.mxu0 0.0
  %1108 = vmatprep.subr.mxu0 0.0
  %1109 = vmatpush1.msra.mxu0 0.0
  %1110 = vmatprep.subr.mxu0 0.0
  %1111 = vmatpush1.msra.mxu0 0.0
  %1112 = vmatprep.subr.mxu0 0.0
  %1113 = vmatpush1.msra.mxu0 0.0
  %1114 = vmatprep.subr.mxu0 0.0
  %1115 = vmatpush1.msra.mxu0 0.0
  %1116 = vmatprep.subr.mxu0 0.0
  %1117 = vmatpush1.msra.mxu0 0.0
  %1118 = vmatprep.subr.mxu0 0.0
  %1119 = vmatpush1.msra.mxu0 0.0
  %1120 = vmatprep.subr.mxu0 0.0
  %1121 = vmatpush1.msra.mxu0 0.0
  %1122 = vmatprep.subr.mxu0 0.0
  %1123 = vmatpush1.msra.mxu0 0.0
  %1124 = vmatprep.subr.mxu0 0.0
  %1125 = vmatpush1.msra.mxu0 0.0
  %1126 = vmatprep.subr.mxu0 0.0
  %1127 = vmatpush1.msra.mxu0 0.0
  %1128 = vmatprep.subr.mxu0 0.0
  %1129 = vmatpush1.msra.mxu0 0.0
  %1130 = vmatprep.subr.mxu0 0.0
  %1131 = vmatpush1.msra.mxu0 0.0
  %1132 = vmatprep.subr.mxu0 0.0
  %1133 = vmatpush1.msra.mxu0 0.0
  %1134 = vmatprep.subr.mxu0 0.0
  %1135 = vmatpush1.msra.mxu0 0.0
  %1136 = vmatprep.subr.mxu0 0.0
  %1137 = vmatpush1.msra.mxu0 0.0
  %1138 = vmatprep.subr.mxu0 0.0
  %1139 = vmatpush1.msra.mxu0 0.0
  %1140 = vmatprep.subr.mxu0 0.0
  %1141 = vmatpush1.msra.mxu0 0.0
  %1142 = vmatprep.subr.mxu0 0.0
  %1143 = vmatpush1.msra.mxu0 0.0
  %1144 = vmatprep.subr.mxu0 0.0
  %1145 = vmatpush1.msra.mxu0 0.0
  %1146 = vmatprep.subr.mxu0 0.0
  %1147 = vmatpush1.msra.mxu0 0.0
  %1148 = vmatprep.subr.mxu0 0.0
  %1149 = vmatpush1.msra.mxu0 0.0
  %1150 = vmatprep.subr.mxu0 0.0
  %1151 = vmatpush1.msra.mxu0 0.0
  %1152 = vmatprep.subr.mxu0 0.0
  %1153 = vmatpush1.msra.mxu0 0.0
  %1154 = vmatprep.subr.mxu0 0.0
  %1155 = vmatpush1.msra.mxu0 0.0
  %1156 = vmatprep.subr.mxu0 0.0
  %1157 = vmatpush1.msra.mxu0 0.0
  %1158 = vmatprep.subr.mxu0 0.0
  %1159 = vmatpush1.msra.mxu0 0.0
  %1160 = vmatprep.subr.mxu0 0.0
  %1161 = vmatpush1.msra.mxu0 0.0
  %1162 = vmatprep.subr.mxu0 0.0
  %1163 = vmatpush1.msra.mxu0 0.0
  %1164 = vmatprep.mubr.f32.mxu0 0.0
  %v1165 = vand.u32 %v40, 4294901760
  %v1166 = vsub.f32 %v40, %v1165
  %1167 = vmatmul.mubr.f32.gmra.mrb[0].mxu0 %v1166
  %v1168 = vpop.f32.mrb[0].mxu0
  %v1169 = vadd.f32 %v1053, %v1168
  %v1170 = vpop.f32.mrb[0].mxu0
  %1171 = vmatprep.mubr.f32.mxu0 0.0
  %v1172 = vand.u32 %v43, 4294901760
  %v1173 = vsub.f32 %v43, %v1172
  %1174 = vmatmul.mubr.f32.gmra.mrb[0].mxu0 %v1173
  %v1175 = vpop.f32.mrb[0].mxu0
  %v1176 = vadd.f32 %v1059, %v1175
  %v1177 = vpop.f32.mrb[0].mxu0
  %1178 = vmatprep.mubr.f32.mxu0 0.0
  %v1179 = vand.u32 %v46, 4294901760
  %v1180 = vsub.f32 %v46, %v1179
  %1181 = vmatmul.mubr.f32.gmra.mrb[0].mxu0 %v1180
  %v1182 = vpop.f32.mrb[0].mxu0
  %v1183 = vadd.f32 %v1065, %v1182
  %v1184 = vpop.f32.mrb[0].mxu0
  %1185 = vmatprep.mubr.f32.mxu0 0.0
  %v1186 = vand.u32 %v49, 4294901760
  %v1187 = vsub.f32 %v49, %v1186
  %1188 = vmatmul.mubr.f32.gmra.mrb[0].mxu0 %v1187
  %v1189 = vpop.f32.mrb[0].mxu0
  %v1190 = vadd.f32 %v1071, %v1189
  %v1191 = vpop.f32.mrb[0].mxu0
  %1192 = vmatprep.mubr.f32.mxu0 0.0
  %v1193 = vand.u32 %v52, 4294901760
  %v1194 = vsub.f32 %v52, %v1193
  %1195 = vmatmul.mubr.f32.gmra.mrb[0].mxu0 %v1194
  %v1196 = vpop.f32.mrb[0].mxu0
  %v1197 = vadd.f32 %v1077, %v1196
  %v1198 = vpop.f32.mrb[0].mxu0
  %1199 = vmatprep.mubr.f32.mxu0 0.0
  %v1200 = vand.u32 %v55, 4294901760
  %v1201 = vsub.f32 %v55, %v1200
  %1202 = vmatmul.mubr.f32.gmra.mrb[0].mxu0 %v1201
  %v1203 = vpop.f32.mrb[0].mxu0
  %v1204 = vadd.f32 %v1083, %v1203
  %v1205 = vpop.f32.mrb[0].mxu0
  %1206 = vmatprep.mubr.f32.mxu0 0.0
  %v1207 = vand.u32 %v58, 4294901760
  %v1208 = vsub.f32 %v58, %v1207
  %1209 = vmatmul.mubr.f32.gmra.mrb[0].mxu0 %v1208
  %v1210 = vpop.f32.mrb[0].mxu0
  %v1211 = vadd.f32 %v1089, %v1210
  %v1212 = vpop.f32.mrb[0].mxu0
  %1213 = vmatprep.mubr.f32.mxu0 0.0
  %v1214 = vand.u32 %v61, 4294901760
  %v1215 = vsub.f32 %v61, %v1214
  %1216 = vmatmul.mubr.f32.gmra.mrb[0].mxu0 %v1215
  %v1217 = vpop.f32.mrb[0].mxu0
  %v1218 = vadd.f32 %v1095, %v1217
  %v1219 = vpop.f32.mrb[0].mxu0
  %1220 = vdwg.mxu0
  %1221 = vmatprep.subr.mxu0 0.0
  %v1222 = vand.u32 %v832, 4294901760
  %1223 = vmatpush1.msra.mxu0 %v1222
  %1224 = vmatprep.subr.mxu0 0.0
  %1225 = vmatpush1.msra.mxu0 0.0
  %1226 = vmatprep.subr.mxu0 0.0
  %1227 = vmatpush1.msra.mxu0 0.0
  %1228 = vmatprep.subr.mxu0 0.0
  %1229 = vmatpush1.msra.mxu0 0.0
  %1230 = vmatprep.subr.mxu0 0.0
  %1231 = vmatpush1.msra.mxu0 0.0
  %1232 = vmatprep.subr.mxu0 0.0
  %1233 = vmatpush1.msra.mxu0 0.0
  %1234 = vmatprep.subr.mxu0 0.0
  %1235 = vmatpush1.msra.mxu0 0.0
  %1236 = vmatprep.subr.mxu0 0.0
  %1237 = vmatpush1.msra.mxu0 0.0
  %1238 = vmatprep.subr.mxu0 0.0
  %1239 = vmatpush1.msra.mxu0 0.0
  %1240 = vmatprep.subr.mxu0 0.0
  %1241 = vmatpush1.msra.mxu0 0.0
  %1242 = vmatprep.subr.mxu0 0.0
  %1243 = vmatpush1.msra.mxu0 0.0
  %1244 = vmatprep.subr.mxu0 0.0
  %1245 = vmatpush1.msra.mxu0 0.0
  %1246 = vmatprep.subr.mxu0 0.0
  %1247 = vmatpush1.msra.mxu0 0.0
  %1248 = vmatprep.subr.mxu0 0.0
  %1249 = vmatpush1.msra.mxu0 0.0
  %1250 = vmatprep.subr.mxu0 0.0
  %1251 = vmatpush1.msra.mxu0 0.0
  %1252 = vmatprep.subr.mxu0 0.0
  %1253 = vmatpush1.msra.mxu0 0.0
  %1254 = vmatprep.subr.mxu0 0.0
  %1255 = vmatpush1.msra.mxu0 0.0
  %1256 = vmatprep.subr.mxu0 0.0
  %1257 = vmatpush1.msra.mxu0 0.0
  %1258 = vmatprep.subr.mxu0 0.0
  %1259 = vmatpush1.msra.mxu0 0.0
  %1260 = vmatprep.subr.mxu0 0.0
  %1261 = vmatpush1.msra.mxu0 0.0
  %1262 = vmatprep.subr.mxu0 0.0
  %1263 = vmatpush1.msra.mxu0 0.0
  %1264 = vmatprep.subr.mxu0 0.0
  %1265 = vmatpush1.msra.mxu0 0.0
  %1266 = vmatprep.subr.mxu0 0.0
  %1267 = vmatpush1.msra.mxu0 0.0
  %1268 = vmatprep.subr.mxu0 0.0
  %1269 = vmatpush1.msra.mxu0 0.0
  %1270 = vmatprep.subr.mxu0 0.0
  %1271 = vmatpush1.msra.mxu0 0.0
  %1272 = vmatprep.subr.mxu0 0.0
  %1273 = vmatpush1.msra.mxu0 0.0
  %1274 = vmatprep.subr.mxu0 0.0
  %1275 = vmatpush1.msra.mxu0 0.0
  %1276 = vmatprep.subr.mxu0 0.0
  %1277 = vmatpush1.msra.mxu0 0.0
  %1278 = vmatprep.subr.mxu0 0.0
  %1279 = vmatpush1.msra.mxu0 0.0
  %1280 = vmatprep.subr.mxu0 0.0
  %1281 = vmatpush1.msra.mxu0 0.0
  %1282 = vmatprep.subr.mxu0 0.0
  %1283 = vmatpush1.msra.mxu0 0.0
  %1284 = vmatprep.subr.mxu0 0.0
  %1285 = vmatpush1.msra.mxu0 0.0
  %1286 = vmatprep.mubr.f32.mxu0 0.0
  %v1287 = vand.u32 %v40, 4294901760
  %v1288 = vsub.f32 %v40, %v1287
  %v1289 = vand.u32 %v1288, 4294901760
  %1290 = vmatmul.mubr.f32.gmra.mrb[0].mxu0 %v1289
  %v1291 = vpop.f32.mrb[0].mxu0
  %v1292 = vadd.f32 %v1169, %v1291
  %v1293 = vpop.f32.mrb[0].mxu0
  %1294 = vmatprep.mubr.f32.mxu0 0.0
  %v1295 = vand.u32 %v43, 4294901760
  %v1296 = vsub.f32 %v43, %v1295
  %v1297 = vand.u32 %v1296, 4294901760
  %1298 = vmatmul.mubr.f32.gmra.mrb[0].mxu0 %v1297
  %v1299 = vpop.f32.mrb[0].mxu0
  %v1300 = vadd.f32 %v1176, %v1299
  %v1301 = vpop.f32.mrb[0].mxu0
  %1302 = vmatprep.mubr.f32.mxu0 0.0
  %v1303 = vand.u32 %v46, 4294901760
  %v1304 = vsub.f32 %v46, %v1303
  %v1305 = vand.u32 %v1304, 4294901760
  %1306 = vmatmul.mubr.f32.gmra.mrb[0].mxu0 %v1305
  %v1307 = vpop.f32.mrb[0].mxu0
  %v1308 = vadd.f32 %v1183, %v1307
  %v1309 = vpop.f32.mrb[0].mxu0
  %1310 = vmatprep.mubr.f32.mxu0 0.0
  %v1311 = vand.u32 %v49, 4294901760
  %v1312 = vsub.f32 %v49, %v1311
  %v1313 = vand.u32 %v1312, 4294901760
  %1314 = vmatmul.mubr.f32.gmra.mrb[0].mxu0 %v1313
  %v1315 = vpop.f32.mrb[0].mxu0
  %v1316 = vadd.f32 %v1190, %v1315
  %v1317 = vpop.f32.mrb[0].mxu0
  %1318 = vmatprep.mubr.f32.mxu0 0.0
  %v1319 = vand.u32 %v52, 4294901760
  %v1320 = vsub.f32 %v52, %v1319
  %v1321 = vand.u32 %v1320, 4294901760
  %1322 = vmatmul.mubr.f32.gmra.mrb[0].mxu0 %v1321
  %v1323 = vpop.f32.mrb[0].mxu0
  %v1324 = vadd.f32 %v1197, %v1323
  %v1325 = vpop.f32.mrb[0].mxu0
  %1326 = vmatprep.mubr.f32.mxu0 0.0
  %v1327 = vand.u32 %v55, 4294901760
  %v1328 = vsub.f32 %v55, %v1327
  %v1329 = vand.u32 %v1328, 4294901760
  %1330 = vmatmul.mubr.f32.gmra.mrb[0].mxu0 %v1329
  %v1331 = vpop.f32.mrb[0].mxu0
  %v1332 = vadd.f32 %v1204, %v1331
  %v1333 = vpop.f32.mrb[0].mxu0
  %1334 = vmatprep.mubr.f32.mxu0 0.0
  %v1335 = vand.u32 %v58, 4294901760
  %v1336 = vsub.f32 %v58, %v1335
  %v1337 = vand.u32 %v1336, 4294901760
  %1338 = vmatmul.mubr.f32.gmra.mrb[0].mxu0 %v1337
  %v1339 = vpop.f32.mrb[0].mxu0
  %v1340 = vadd.f32 %v1211, %v1339
  %v1341 = vpop.f32.mrb[0].mxu0
  %1342 = vmatprep.mubr.f32.mxu0 0.0
  %v1343 = vand.u32 %v61, 4294901760
  %v1344 = vsub.f32 %v61, %v1343
  %v1345 = vand.u32 %v1344, 4294901760
  %1346 = vmatmul.mubr.f32.gmra.mrb[0].mxu0 %v1345
  %v1347 = vpop.f32.mrb[0].mxu0
  %v1348 = vadd.f32 %v1218, %v1347
  %v1349 = vpop.f32.mrb[0].mxu0
  %1350 = vdwg.mxu0
  %1351 = vmatprep.subr.mxu0 0.0
  %v1352 = vand.u32 %v832, 4294901760
  %v1353 = vsub.f32 %v832, %v1352
  %v1354 = vand.u32 %v1353, 4294901760
  %1355 = vmatpush1.msra.mxu0 %v1354
  %1356 = vmatprep.subr.mxu0 0.0
  %1357 = vmatpush1.msra.mxu0 0.0
  %1358 = vmatprep.subr.mxu0 0.0
  %1359 = vmatpush1.msra.mxu0 0.0
  %1360 = vmatprep.subr.mxu0 0.0
  %1361 = vmatpush1.msra.mxu0 0.0
  %1362 = vmatprep.subr.mxu0 0.0
  %1363 = vmatpush1.msra.mxu0 0.0
  %1364 = vmatprep.subr.mxu0 0.0
  %1365 = vmatpush1.msra.mxu0 0.0
  %1366 = vmatprep.subr.mxu0 0.0
  %1367 = vmatpush1.msra.mxu0 0.0
  %1368 = vmatprep.subr.mxu0 0.0
  %1369 = vmatpush1.msra.mxu0 0.0
  %1370 = vmatprep.subr.mxu0 0.0
  %1371 = vmatpush1.msra.mxu0 0.0
  %1372 = vmatprep.subr.mxu0 0.0
  %1373 = vmatpush1.msra.mxu0 0.0
  %1374 = vmatprep.subr.mxu0 0.0
  %1375 = vmatpush1.msra.mxu0 0.0
  %1376 = vmatprep.subr.mxu0 0.0
  %1377 = vmatpush1.msra.mxu0 0.0
  %1378 = vmatprep.subr.mxu0 0.0
  %1379 = vmatpush1.msra.mxu0 0.0
  %1380 = vmatprep.subr.mxu0 0.0
  %1381 = vmatpush1.msra.mxu0 0.0
  %1382 = vmatprep.subr.mxu0 0.0
  %1383 = vmatpush1.msra.mxu0 0.0
  %1384 = vmatprep.subr.mxu0 0.0
  %1385 = vmatpush1.msra.mxu0 0.0
  %1386 = vmatprep.subr.mxu0 0.0
  %1387 = vmatpush1.msra.mxu0 0.0
  %1388 = vmatprep.subr.mxu0 0.0
  %1389 = vmatpush1.msra.mxu0 0.0
  %1390 = vmatprep.subr.mxu0 0.0
  %1391 = vmatpush1.msra.mxu0 0.0
  %1392 = vmatprep.subr.mxu0 0.0
  %1393 = vmatpush1.msra.mxu0 0.0
  %1394 = vmatprep.subr.mxu0 0.0
  %1395 = vmatpush1.msra.mxu0 0.0
  %1396 = vmatprep.subr.mxu0 0.0
  %1397 = vmatpush1.msra.mxu0 0.0
  %1398 = vmatprep.subr.mxu0 0.0
  %1399 = vmatpush1.msra.mxu0 0.0
  %1400 = vmatprep.subr.mxu0 0.0
  %1401 = vmatpush1.msra.mxu0 0.0
  %1402 = vmatprep.subr.mxu0 0.0
  %1403 = vmatpush1.msra.mxu0 0.0
  %1404 = vmatprep.subr.mxu0 0.0
  %1405 = vmatpush1.msra.mxu0 0.0
  %1406 = vmatprep.subr.mxu0 0.0
  %1407 = vmatpush1.msra.mxu0 0.0
  %1408 = vmatprep.subr.mxu0 0.0
  %1409 = vmatpush1.msra.mxu0 0.0
  %1410 = vmatprep.subr.mxu0 0.0
  %1411 = vmatpush1.msra.mxu0 0.0
  %1412 = vmatprep.subr.mxu0 0.0
  %1413 = vmatpush1.msra.mxu0 0.0
  %1414 = vmatprep.subr.mxu0 0.0
  %1415 = vmatpush1.msra.mxu0 0.0
  %1416 = vmatprep.subr.mxu0 0.0
  %1417 = vmatpush1.msra.mxu0 0.0
  %1418 = vmatprep.mubr.f32.mxu0 0.0
  %v1419 = vand.u32 %v40, 4294901760
  %1420 = vmatmul.mubr.f32.gmra.mrb[0].mxu0 %v1419
  %v1421 = vpop.f32.mrb[0].mxu0
  %v1422 = vadd.f32 %v1292, %v1421
  %v1423 = vpop.f32.mrb[0].mxu0
  %1424 = vmatprep.mubr.f32.mxu0 0.0
  %v1425 = vand.u32 %v43, 4294901760
  %1426 = vmatmul.mubr.f32.gmra.mrb[0].mxu0 %v1425
  %v1427 = vpop.f32.mrb[0].mxu0
  %v1428 = vadd.f32 %v1300, %v1427
  %v1429 = vpop.f32.mrb[0].mxu0
  %1430 = vmatprep.mubr.f32.mxu0 0.0
  %v1431 = vand.u32 %v46, 4294901760
  %1432 = vmatmul.mubr.f32.gmra.mrb[0].mxu0 %v1431
  %v1433 = vpop.f32.mrb[0].mxu0
  %v1434 = vadd.f32 %v1308, %v1433
  %v1435 = vpop.f32.mrb[0].mxu0
  %1436 = vmatprep.mubr.f32.mxu0 0.0
  %v1437 = vand.u32 %v49, 4294901760
  %1438 = vmatmul.mubr.f32.gmra.mrb[0].mxu0 %v1437
  %v1439 = vpop.f32.mrb[0].mxu0
  %v1440 = vadd.f32 %v1316, %v1439
  %v1441 = vpop.f32.mrb[0].mxu0
  %1442 = vmatprep.mubr.f32.mxu0 0.0
  %v1443 = vand.u32 %v52, 4294901760
  %1444 = vmatmul.mubr.f32.gmra.mrb[0].mxu0 %v1443
  %v1445 = vpop.f32.mrb[0].mxu0
  %v1446 = vadd.f32 %v1324, %v1445
  %v1447 = vpop.f32.mrb[0].mxu0
  %1448 = vmatprep.mubr.f32.mxu0 0.0
  %v1449 = vand.u32 %v55, 4294901760
  %1450 = vmatmul.mubr.f32.gmra.mrb[0].mxu0 %v1449
  %v1451 = vpop.f32.mrb[0].mxu0
  %v1452 = vadd.f32 %v1332, %v1451
  %v1453 = vpop.f32.mrb[0].mxu0
  %1454 = vmatprep.mubr.f32.mxu0 0.0
  %v1455 = vand.u32 %v58, 4294901760
  %1456 = vmatmul.mubr.f32.gmra.mrb[0].mxu0 %v1455
  %v1457 = vpop.f32.mrb[0].mxu0
  %v1458 = vadd.f32 %v1340, %v1457
  %v1459 = vpop.f32.mrb[0].mxu0
  %1460 = vmatprep.mubr.f32.mxu0 0.0
  %v1461 = vand.u32 %v61, 4294901760
  %1462 = vmatmul.mubr.f32.gmra.mrb[0].mxu0 %v1461
  %v1463 = vpop.f32.mrb[0].mxu0
  %v1464 = vadd.f32 %v1348, %v1463
  %v1465 = vpop.f32.mrb[0].mxu0
  %1466 = vdwg.mxu0
  %1467 = vmatprep.subr.mxu0 0.0
  %v1468 = vand.u32 %v832, 4294901760
  %1469 = vmatpush1.msra.mxu0 %v1468
  %1470 = vmatprep.subr.mxu0 0.0
  %1471 = vmatpush1.msra.mxu0 0.0
  %1472 = vmatprep.subr.mxu0 0.0
  %1473 = vmatpush1.msra.mxu0 0.0
  %1474 = vmatprep.subr.mxu0 0.0
  %1475 = vmatpush1.msra.mxu0 0.0
  %1476 = vmatprep.subr.mxu0 0.0
  %1477 = vmatpush1.msra.mxu0 0.0
  %1478 = vmatprep.subr.mxu0 0.0
  %1479 = vmatpush1.msra.mxu0 0.0
  %1480 = vmatprep.subr.mxu0 0.0
  %1481 = vmatpush1.msra.mxu0 0.0
  %1482 = vmatprep.subr.mxu0 0.0
  %1483 = vmatpush1.msra.mxu0 0.0
  %1484 = vmatprep.subr.mxu0 0.0
  %1485 = vmatpush1.msra.mxu0 0.0
  %1486 = vmatprep.subr.mxu0 0.0
  %1487 = vmatpush1.msra.mxu0 0.0
  %1488 = vmatprep.subr.mxu0 0.0
  %1489 = vmatpush1.msra.mxu0 0.0
  %1490 = vmatprep.subr.mxu0 0.0
  %1491 = vmatpush1.msra.mxu0 0.0
  %1492 = vmatprep.subr.mxu0 0.0
  %1493 = vmatpush1.msra.mxu0 0.0
  %1494 = vmatprep.subr.mxu0 0.0
  %1495 = vmatpush1.msra.mxu0 0.0
  %1496 = vmatprep.subr.mxu0 0.0
  %1497 = vmatpush1.msra.mxu0 0.0
  %1498 = vmatprep.subr.mxu0 0.0
  %1499 = vmatpush1.msra.mxu0 0.0
  %1500 = vmatprep.subr.mxu0 0.0
  %1501 = vmatpush1.msra.mxu0 0.0
  %1502 = vmatprep.subr.mxu0 0.0
  %1503 = vmatpush1.msra.mxu0 0.0
  %1504 = vmatprep.subr.mxu0 0.0
  %1505 = vmatpush1.msra.mxu0 0.0
  %1506 = vmatprep.subr.mxu0 0.0
  %1507 = vmatpush1.msra.mxu0 0.0
  %1508 = vmatprep.subr.mxu0 0.0
  %1509 = vmatpush1.msra.mxu0 0.0
  %1510 = vmatprep.subr.mxu0 0.0
  %1511 = vmatpush1.msra.mxu0 0.0
  %1512 = vmatprep.subr.mxu0 0.0
  %1513 = vmatpush1.msra.mxu0 0.0
  %1514 = vmatprep.subr.mxu0 0.0
  %1515 = vmatpush1.msra.mxu0 0.0
  %1516 = vmatprep.subr.mxu0 0.0
  %1517 = vmatpush1.msra.mxu0 0.0
  %1518 = vmatprep.subr.mxu0 0.0
  %1519 = vmatpush1.msra.mxu0 0.0
  %1520 = vmatprep.subr.mxu0 0.0
  %1521 = vmatpush1.msra.mxu0 0.0
  %1522 = vmatprep.subr.mxu0 0.0
  %1523 = vmatpush1.msra.mxu0 0.0
  %1524 = vmatprep.subr.mxu0 0.0
  %1525 = vmatpush1.msra.mxu0 0.0
  %1526 = vmatprep.subr.mxu0 0.0
  %1527 = vmatpush1.msra.mxu0 0.0
  %1528 = vmatprep.subr.mxu0 0.0
  %1529 = vmatpush1.msra.mxu0 0.0
  %1530 = vmatprep.subr.mxu0 0.0
  %1531 = vmatpush1.msra.mxu0 0.0
  %1532 = vmatprep.mubr.f32.mxu0 0.0
  %v1533 = vand.u32 %v40, 4294901760
  %1534 = vmatmul.mubr.f32.gmra.mrb[0].mxu0 %v1533
  %v1535 = vpop.f32.mrb[0].mxu0
  %v1536 = vadd.f32 %v1422, %v1535
  %v1537 = vpop.f32.mrb[0].mxu0
  %1538 = vmatprep.mubr.f32.mxu0 0.0
  %v1539 = vand.u32 %v43, 4294901760
  %1540 = vmatmul.mubr.f32.gmra.mrb[0].mxu0 %v1539
  %v1541 = vpop.f32.mrb[0].mxu0
  %v1542 = vadd.f32 %v1428, %v1541
  %v1543 = vpop.f32.mrb[0].mxu0
  %1544 = vmatprep.mubr.f32.mxu0 0.0
  %v1545 = vand.u32 %v46, 4294901760
  %1546 = vmatmul.mubr.f32.gmra.mrb[0].mxu0 %v1545
  %v1547 = vpop.f32.mrb[0].mxu0
  %v1548 = vadd.f32 %v1434, %v1547
  %v1549 = vpop.f32.mrb[0].mxu0
  %1550 = vmatprep.mubr.f32.mxu0 0.0
  %v1551 = vand.u32 %v49, 4294901760
  %1552 = vmatmul.mubr.f32.gmra.mrb[0].mxu0 %v1551
  %v1553 = vpop.f32.mrb[0].mxu0
  %v1554 = vadd.f32 %v1440, %v1553
  %v1555 = vpop.f32.mrb[0].mxu0
  %1556 = vmatprep.mubr.f32.mxu0 0.0
  %v1557 = vand.u32 %v52, 4294901760
  %1558 = vmatmul.mubr.f32.gmra.mrb[0].mxu0 %v1557
  %v1559 = vpop.f32.mrb[0].mxu0
  %v1560 = vadd.f32 %v1446, %v1559
  %v1561 = vpop.f32.mrb[0].mxu0
  %1562 = vmatprep.mubr.f32.mxu0 0.0
  %v1563 = vand.u32 %v55, 4294901760
  %1564 = vmatmul.mubr.f32.gmra.mrb[0].mxu0 %v1563
  %v1565 = vpop.f32.mrb[0].mxu0
  %v1566 = vadd.f32 %v1452, %v1565
  %v1567 = vpop.f32.mrb[0].mxu0
  %1568 = vmatprep.mubr.f32.mxu0 0.0
  %v1569 = vand.u32 %v58, 4294901760
  %1570 = vmatmul.mubr.f32.gmra.mrb[0].mxu0 %v1569
  %v1571 = vpop.f32.mrb[0].mxu0
  %v1572 = vadd.f32 %v1458, %v1571
  %v1573 = vpop.f32.mrb[0].mxu0
  %1574 = vmatprep.mubr.f32.mxu0 0.0
  %v1575 = vand.u32 %v61, 4294901760
  %1576 = vmatmul.mubr.f32.gmra.mrb[0].mxu0 %v1575
  %v1577 = vpop.f32.mrb[0].mxu0
  %v1578 = vadd.f32 %v1464, %v1577
  %v1579 = vpop.f32.mrb[0].mxu0
  %1580 = vdwg.mxu0
  %vm1581 = vcmask 31744
  %1582 = vst.msk [vmem:[%s6] sm:$0xff] %vm1581, %v1536
  %1583 = vst.msk [vmem:[%s6 + $0x8] sm:$0xff] %vm1581, %v1542
  %1584 = vst.msk [vmem:[%s6 + $0x10] sm:$0xff] %vm1581, %v1548
  %1585 = vst.msk [vmem:[%s6 + $0x18] sm:$0xff] %vm1581, %v1554
  %1586 = vst.msk [vmem:[%s6 + $0x20] sm:$0xff] %vm1581, %v1560
  %1587 = vst.msk [vmem:[%s6 + $0x28] sm:$0xff] %vm1581, %v1566
  %1588 = vst.msk [vmem:[%s6 + $0x30] sm:$0xff] %vm1581, %v1572
  %1589 = vst.msk [vmem:[%s6 + $0x38] sm:$0xff] %vm1581, %v1578
  // Predicated region
  $region22: #{tpu_custom_call.1} parent=0 // pred_check
    _
  $region23: #{tpu_custom_call.1} parent=0 // pred_check_branch
    %1591 = sbr.rel (0) target = $region25
  $region24: #{tpu_custom_call.1} parent=0 // pred_region
    _
  $region25: #{tpu_custom_call.1} parent=0 // pred_fallthru
    _
  // Predicated region
  $region26: #{tpu_custom_call.1} parent=0 // pred_check
    _
  $region27: #{tpu_custom_call.1} parent=0 // pred_check_branch
    %1593 = sbr.rel (0) target = $region29
  $region28: #{tpu_custom_call.1} parent=0 // pred_region
    _
  $region29: #{tpu_custom_call.1} parent=0 // pred_fallthru
    _
  // Predicated region
  $region30: #{tpu_custom_call.1} parent=0 // pred_check
    _
  $region31: #{tpu_custom_call.1} parent=0 // pred_check_branch
    %1595 = sbr.rel (0) target = $region33
  $region32: #{tpu_custom_call.1} parent=0 // pred_region
    _
  $region33: #{tpu_custom_call.1} parent=0 // pred_fallthru
    _
  // Predicated region
  $region34: #{tpu_custom_call.1} parent=0 // pred_check
    _
  $region35: #{tpu_custom_call.1} parent=0 // pred_check_branch
    %1597 = sbr.rel (0) target = $region37
  $region36: #{tpu_custom_call.1} parent=0 // pred_region
    _
  $region37: #{tpu_custom_call.1} parent=0 // pred_fallthru
    _

</llo_original>
